<compile_context>
chip_gen: v6e
topology: v6e:2x2x1
jax: 0.10.0
libtpu: 0.0.40
codegen_flags: <defaults>
</compile_context>

<pallas_src>
import functools

import jax
import jax.numpy as jnp
from jax.experimental import pallas as pl
from jax.experimental.pallas import tpu as pltpu


def _round_up(x, m):
    return ((x + m - 1) // m) * m


_INTERNAL_SCRATCH = 1 << 20  # ~1 MiB headroom for Mosaic internal scratch


@functools.lru_cache(maxsize=None)
def _default_vmem_budget_bytes():
    """Generation-aware VMEM budget: half the physical per-core VMEM, capped at 64 MiB.
    (v5e/v6e: 128 MiB physical -> 64 MiB budget; v7x: 64 MiB physical -> 32 MiB.)"""
    cap = 64 * 1024 * 1024  # conservative default if the query is unavailable
    try:
        info = pltpu.get_tpu_info()
        cap = int(getattr(info, "vmem_capacity_bytes", cap))
    except Exception:
        pass
    return max(16 * 1024 * 1024, min(cap // 2, 64 * 1024 * 1024))


def _linear_relu_single_k(x_ref, w_ref, b_ref, o_ref):
    """Whole K resident: single MXU pass, fused bias + ReLU, lane-dense store.
    x is cast to the weight dtype in-kernel (no activation copy in HBM)."""
    x = x_ref[...].astype(w_ref.dtype)
    acc = jnp.dot(x, w_ref[...], preferred_element_type=jnp.float32)
    o_ref[...] = jnp.maximum(acc + b_ref[...], 0.0).astype(o_ref.dtype)


def _linear_relu_multi_k(x_ref, w_ref, b_ref, o_ref):
    """K-tiled reduction: accumulate directly into the resident f32 output block."""
    k = pl.program_id(2)

    @pl.when(k == 0)
    def _():
        o_ref[...] = jnp.zeros_like(o_ref)

    o_ref[...] += jnp.dot(
        x_ref[...].astype(w_ref.dtype), w_ref[...],
        preferred_element_type=jnp.float32)

    @pl.when(k == pl.num_programs(2) - 1)
    def _():
        # bias + ReLU fused into the finalize step
        o_ref[...] = jnp.maximum(o_ref[...] + b_ref[...], 0.0)


def prepare_linear_params(w, b, compute_dtype=jnp.bfloat16):
    """One-time parameter prep (do this at model-load time, NOT per call):
    PyTorch (N, K) weight -> (K, N) in the compute dtype, bias -> f32."""
    return w.T.astype(compute_dtype), b.astype(jnp.float32)


@functools.partial(jax.jit, static_argnames=("compute_dtype", "vmem_budget_bytes"))
def frame_reduce_dim(video_tensor, w_t, b, *, compute_dtype=jnp.bfloat16,
                     vmem_budget_bytes=None):
    """relu(Linear(video_tensor)) over the feature (last) dim.

    video_tensor: (vid_num, vid_len, feature_dim) float32
    w_t:          (feature_dim, hidden_dim) -- transposed nn.Linear weight,
                  ideally already stored in `compute_dtype` (see prepare_linear_params)
    b:            (hidden_dim,)
    returns:      (vid_num, vid_len, hidden_dim) float32
    """
    vid_num, vid_len, K = video_tensor.shape
    Kw, N = w_t.shape
    assert Kw == K, "weight feature dim must match video feature dim"
    M = vid_num * vid_len

    x = video_tensor.reshape(M, K)              # keep input dtype; cast happens in-kernel
    w_in = w_t if w_t.dtype == jnp.dtype(compute_dtype) else w_t.astype(compute_dtype)
    b_in = b.reshape(1, N).astype(jnp.float32)

    x_isz = jnp.dtype(x.dtype).itemsize
    w_isz = jnp.dtype(compute_dtype).itemsize

    budget = (vmem_budget_bytes if vmem_budget_bytes is not None
              else _default_vmem_budget_bytes())

    # --- M tiling: M is tiny for this module (vid_num * vid_len); only tile huge M. ---
    if M <= 1024:
        tm, grid_m, M_pad = M, 1, M             # full-dim block: no (8,128) constraint
    else:
        tm = 256
        grid_m = -(-M // tm)
        M_pad = grid_m * tm

    # --- N tiling: split into 2 "parallel" blocks when N allows so both v7x
    #     TensorCores share the weight read; blocks stay lane-dense (>=128). ---
    if N % 256 == 0:
        grid_n, tn = 2, N // 2
    else:
        grid_n, tn = 1, N                       # full-dim block (ragged N handled)

    def est_single(tn_):
        return (2 * tm * K * x_isz              # x tile, double-buffered
                + 2 * K * tn_ * w_isz           # W tile, double-buffered
                + 2 * tm * tn_ * 4              # f32 out tile, double-buffered
                + 2 * tn_ * 4                   # bias
                + _INTERNAL_SCRATCH)

    # Shrink tn (staying a multiple of 128) before giving up on the single-pass path.
    while est_single(tn) > budget and tn % 256 == 0:
        tn //= 2
        grid_n *= 2

    cost = pl.CostEstimate(
        flops=2 * M * K * N,
        transcendentals=0,
        bytes_accessed=M * K * x_isz + K * N * w_isz + N * 4 + M * N * 4)

    if est_single(tn) <= budget:
        # ---- fast path: whole K per block, one MXU pass, no padding / no copies ----
        x_in = x if M_pad == M else jnp.pad(x, ((0, M_pad - M), (0, 0)))
        out = pl.pallas_call(
            _linear_relu_single_k,
            out_shape=jax.ShapeDtypeStruct((M_pad, N), jnp.float32),
            grid_spec=pltpu.PrefetchScalarGridSpec(
                num_scalar_prefetch=0,
                grid=(grid_m, grid_n),
                in_specs=[
                    pl.BlockSpec((tm, K), lambda i, n: (i, 0)),    # x tile (f32)
                    pl.BlockSpec((K, tn), lambda i, n: (0, n)),    # W column block
                    pl.BlockSpec((1, tn), lambda i, n: (0, n)),    # bias block
                ],
                out_specs=pl.BlockSpec((tm, tn), lambda i, n: (i, n)),
            ),
            compiler_params=pltpu.CompilerParams(
                dimension_semantics=("parallel", "parallel"),
                vmem_limit_bytes=int(budget)),
            cost_estimate=cost,
        )(x_in, w_in, b_in)
    else:
        # ---- large-K fallback: tile K (innermost, "arbitrary") and N ----
        if N % 256 == 0:
            grid_n, tn = 2, N // 2
        else:
            grid_n, tn = 1, N

        def est_multi(tk_, tn_):
            return (2 * tm * tk_ * x_isz + 2 * tk_ * tn_ * w_isz
                    + 2 * tm * tn_ * 4 + 2 * tn_ * 4 + _INTERNAL_SCRATCH)

        tk = _round_up(K, 128)
        while est_multi(tk, tn) > budget and tk > 128:
            tk = max(128, _round_up(tk // 2, 128))
        while est_multi(tk, tn) > budget and tn % 256 == 0:
            tn //= 2
            grid_n *= 2

        grid_k = -(-K // tk)
        K_pad = grid_k * tk

        if M_pad != M or K_pad != K:
            x_in = jnp.pad(x, ((0, M_pad - M), (0, K_pad - K)))
        else:
            x_in = x
        if K_pad != K:
            w_in = jnp.pad(w_in, ((0, K_pad - K), (0, 0)))

        out = pl.pallas_call(
            _linear_relu_multi_k,
            out_shape=jax.ShapeDtypeStruct((M_pad, N), jnp.float32),
            grid_spec=pltpu.PrefetchScalarGridSpec(
                num_scalar_prefetch=0,
                grid=(grid_m, grid_n, grid_k),
                in_specs=[
                    pl.BlockSpec((tm, tk), lambda i, n, k: (i, k)),   # x tile
                    pl.BlockSpec((tk, tn), lambda i, n, k: (k, n)),   # W tile
                    pl.BlockSpec((1, tn), lambda i, n, k: (0, n)),    # bias
                ],
                out_specs=pl.BlockSpec((tm, tn), lambda i, n, k: (i, n)),
            ),
            compiler_params=pltpu.CompilerParams(
                dimension_semantics=("parallel", "parallel", "arbitrary"),
                vmem_limit_bytes=int(budget)),
            cost_estimate=cost,
        )(x_in, w_in, b_in)

    return out[:M].reshape(vid_num, vid_len, N)


# TODO(synk): event_encoder / caption_decoder / METEOR-based get_caption_reward are
# external host-side or undefined submodules and are not representable as Pallas kernels.


def _bf16_reference(video_tensor, w, b):
    """Reference with the same bf16-quantized operands, f32 accumulation."""
    vid_num, vid_len, K = video_tensor.shape
    N = w.shape[0]
    x2 = video_tensor.reshape(-1, K).astype(jnp.bfloat16).astype(jnp.float32)
    wt = w.T.astype(jnp.bfloat16).astype(jnp.float32)
    y = jnp.dot(x2, wt, precision=jax.lax.Precision.HIGHEST) + b
    return jnp.maximum(y, 0.0).reshape(vid_num, vid_len, N)


if __name__ == "__main__":
    # Module semantics: frame_reduce_dim_layer only exists when feature_dim > 1024,
    # mapping feature_dim -> hidden_dim.
    vid_num, vid_len = 2, 8
    feature_dim, hidden_dim = 2048, 512

    key = jax.random.PRNGKey(0)
    k_x, k_w, k_b = jax.random.split(key, 3)

    video_tensor = jax.random.normal(
        k_x, (vid_num, vid_len, feature_dim), dtype=jnp.float32)
    # Deterministic nn.Linear-like init, PyTorch layout (out, in).
    bound = 1.0 / (feature_dim ** 0.5)
    w = jax.random.uniform(
        k_w, (hidden_dim, feature_dim), minval=-bound, maxval=bound, dtype=jnp.float32)
    b = jax.random.uniform(
        k_b, (hidden_dim,), minval=-bound, maxval=bound, dtype=jnp.float32)

    # Weights prepared ONCE in bf16-at-rest (K, N) layout: the per-call wrapper then
    # does no pad/cast at all (the review's biggest HBM-traffic lever).
    w_t_bf16, b_f32 = prepare_linear_params(w, b)

    # --- main path: single-pass kernel, N split across 2 "parallel" blocks ---
    out = jax.block_until_ready(frame_reduce_dim(video_tensor, w_t_bf16, b_f32))
    assert out.shape == (vid_num, vid_len, hidden_dim)

    ref_bf16 = _bf16_reference(video_tensor, w, b)
    ref_f32 = jnp.maximum(
        video_tensor.reshape(-1, feature_dim) @ w.T + b, 0.0
    ).reshape(vid_num, vid_len, hidden_dim)
    assert jnp.allclose(out, ref_bf16, atol=2e-3, rtol=2e-3)
    assert jnp.allclose(out, ref_f32, atol=5e-2, rtol=5e-2)

    # --- ragged shapes (M=15 rows, N=300): full-dim blocks, still no padding/copies ---
    vn2, vl2, fd2, hd2 = 3, 5, 1280, 300
    kx2, kw2, kb2 = jax.random.split(jax.random.PRNGKey(1), 3)
    vt2 = jax.random.normal(kx2, (vn2, vl2, fd2), dtype=jnp.float32)
    bnd2 = 1.0 / (fd2 ** 0.5)
    w2 = jax.random.uniform(kw2, (hd2, fd2), minval=-bnd2, maxval=bnd2, dtype=jnp.float32)
    b2 = jax.random.uniform(kb2, (hd2,), minval=-bnd2, maxval=bnd2, dtype=jnp.float32)
    w2_t, b2_f = prepare_linear_params(w2, b2)
    out2 = jax.block_until_ready(frame_reduce_dim(vt2, w2_t, b2_f))
    assert out2.shape == (vn2, vl2, hd2)
    assert jnp.allclose(out2, _bf16_reference(vt2, w2, b2), atol=2e-3, rtol=2e-3)

    # --- force the K-tiled accumulate fallback with a tiny VMEM budget ---
    out3 = jax.block_until_ready(
        frame_reduce_dim(video_tensor, w_t_bf16, b_f32,
                         vmem_budget_bytes=2 * 1024 * 1024))
    assert out3.shape == (vid_num, vid_len, hidden_dim)
    assert jnp.allclose(out3, ref_bf16, atol=2e-3, rtol=2e-3)

    print("KERNEL_OK")
</pallas_src>

<mosaic_0001>
module attributes {stable_mosaic.version = 11 : i64} {
  func.func @_linear_relu_single_k(%arg0: i32, %arg1: i32, %arg2: memref<16x2048xf32, #tpu.memory_space<vmem>>, %arg3: memref<2048x256xbf16, #tpu.memory_space<vmem>>, %arg4: memref<1x256xf32, #tpu.memory_space<vmem>>, %arg5: memref<16x256xf32, #tpu.memory_space<vmem>>) attributes {dimension_semantics = [#tpu.dimension_semantics<parallel>, #tpu.dimension_semantics<parallel>], iteration_bounds = array<i64: 1, 2>, scalar_prefetch = 0 : i64, scratch_operands = 0 : i64, tpu.core_type = #tpu.core_type<tc>, window_params = [{transform_indices = @transform_0, window_bounds = array<i64: 16, 2048>}, {transform_indices = @transform_1, window_bounds = array<i64: 2048, 256>}, {transform_indices = @transform_2, window_bounds = array<i64: 1, 256>}, {transform_indices = @transform_3, window_bounds = array<i64: 16, 256>}]} {
    %c0 = arith.constant 0 : index
    %c0_0 = arith.constant 0 : index
    %0 = vector.load %arg2[%c0, %c0_0] : memref<16x2048xf32, #tpu.memory_space<vmem>>, vector<16x2048xf32>
    %1 = arith.truncf %0 : vector<16x2048xf32> to vector<16x2048xbf16>
    %c0_1 = arith.constant 0 : index
    %c0_2 = arith.constant 0 : index
    %2 = vector.load %arg3[%c0_1, %c0_2] : memref<2048x256xbf16, #tpu.memory_space<vmem>>, vector<2048x256xbf16>
    %cst = arith.constant dense<0.000000e+00> : vector<16x256xf32>
    %3 = tpu.matmul %1, %2, %cst {dimension_numbers = #tpu.dot_dimension_numbers<[1], [0], [0], [1], [0, 0, 1, 1], [], []>} : vector<16x2048xbf16>, vector<2048x256xbf16>, vector<16x256xf32> -> vector<16x256xf32>
    %c0_3 = arith.constant 0 : index
    %c0_4 = arith.constant 0 : index
    %4 = vector.load %arg4[%c0_3, %c0_4] : memref<1x256xf32, #tpu.memory_space<vmem>>, vector<1x256xf32>
    %5 = vector.broadcast %4 : vector<1x256xf32> to vector<16x256xf32>
    %6 = arith.addf %3, %5 : vector<16x256xf32>
    %cst_5 = arith.constant 0.000000e+00 : f32
    %7 = vector.broadcast %cst_5 : f32 to vector<16x256xf32>
    %8 = arith.maximumf %6, %7 : vector<16x256xf32>
    %c0_6 = arith.constant 0 : index
    %c0_7 = arith.constant 0 : index
    %9 = vector.load %arg5[%c0_6, %c0_7] : memref<16x256xf32, #tpu.memory_space<vmem>>, vector<16x256xf32>
    tpu.vector_store %arg5[%c0_6, %c0_7], %8 {strides = array<i32>} : memref<16x256xf32, #tpu.memory_space<vmem>>, vector<16x256xf32>,
    return
  }
  func.func @transform_0(%arg0: i32, %arg1: i32) -> (i32, i32) {
    %c0_i32 = arith.constant 0 : i32
    %c0_i32_0 = arith.constant 0 : i32
    return %arg0, %c0_i32 : i32, i32
  }
  func.func @transform_1(%arg0: i32, %arg1: i32) -> (i32, i32) {
    %c0_i32 = arith.constant 0 : i32
    %c0_i32_0 = arith.constant 0 : i32
    return %c0_i32, %arg1 : i32, i32
  }
  func.func @transform_2(%arg0: i32, %arg1: i32) -> (i32, i32) {
    %c0_i32 = arith.constant 0 : i32
    %c0_i32_0 = arith.constant 0 : i32
    return %c0_i32, %arg1 : i32, i32
  }
  func.func @transform_3(%arg0: i32, %arg1: i32) -> (i32, i32) {
    %c0_i32 = arith.constant 0 : i32
    return %arg0, %arg1 : i32, i32
  }
}

</mosaic_0001>

<llo_original>
// kernel: frame_reduce_dim.1
$region0: #{frame_reduce_dim.1}
  #allocation0 [shape = 'u32[]', space=smem, size = 0x4, offset = 0x4, fixed_abs, tag = 'smem constant byte address 0x4 - core index']
  #allocation1 [shape = 'u32[144,128]{1,0:T(1,128)}', space=vmem, size = 0x12000, scoped, tag = 'internal scratch']
  %s0 = inlined_call_operand.hbm [shape: f32[16,2048], index: 0, kind: input, shape index: {}]
  %s1 = inlined_call_operand.hbm [shape: bf16[2048,512], index: 1, kind: input, shape index: {}]
  %s2 = inlined_call_operand.hbm [shape: f32[1,512], index: 2, kind: input, shape index: {}]
  %s3 = inlined_call_operand.hbm [shape: f32[16,512], index: 3, kind: output, shape index: {}]
  %s4 = sld [smem:[#allocation0]]
  $region57: #{frame_reduce_dim.1} parent=0
    _
  %s6 = ssub.s32 1, %s4
  %s7 = scalar_select 0, %s6, %s4
  $region1: #{frame_reduce_dim.1} parent=0
    #allocation2 [shape = 'u8[131072]{0}', space=vmem, size = 0x20000, scoped, tag = 'input window, operand 0, single buffered']
    #allocation3 [shape = 's32[2]{0}', space=sflag, size = 0x8, scoped, tag = 'scoped memory for frame_reduce_dim.1']
    #allocation4 [shape = 's32[2]{0}', space=sflag, size = 0x8, scoped, tag = 'scoped memory for frame_reduce_dim.1']
    #allocation5 [shape = 'u8[2097152]{0}', space=vmem, size = 0x200000, scoped, tag = 'input window, operand 1']
    #allocation6 [shape = 's32[2]{0}', space=sflag, size = 0x8, scoped, tag = 'scoped memory for frame_reduce_dim.1']
    #allocation7 [shape = 'u8[2048]{0}', space=vmem, size = 0x800, scoped, tag = 'input window, operand 2']
    #allocation8 [shape = 'u8[32768]{0}', space=vmem, size = 0x8000, scoped, tag = 'output window, operand 0']
    %8 = vsyncpa [#allocation3], 0
    %9 = vsyncpa [#allocation6], 0
    %s10 = scalar_lea.sflag [#allocation6], 1
    %11 = vsyncpa %s10, 0
    %12 = vsyncpa [#allocation4], 0
    %s13 = scalar_lea.sflag [#allocation4], 1
    %14 = vsyncpa %s13, 0
    loop: start=0, step=1, limit=4
    $region2: #{frame_reduce_dim.1} parent=1 // loop_pre_header
      _
    $region3: #{frame_reduce_dim.1} parent=1 // loop_header
      %s16 = sphi 0, %s20
      %p17 = scmp.ge.s32.totalorder %s16, 4
      %s23 = sphi 0, %s35
      %s24 = sphi 0, %s31
      %s25 = sphi 0, %s23
      %s26 = sphi 0, %s24
      %s27 = sphi 0, %s25
      %s28 = sphi 0, %s26
      %s38 = sphi 0, %s40
      %s41 = sphi 0, %s38
      %s42 = sphi 0, %s41
      %s58 = sphi 0, %s42
      %s64 = sphi 0, %s66
      %s67 = sphi 0, %s64
      %s68 = sphi 0, %s67
      %s84 = sphi 0, %s68
      %s90 = sphi 0, %s92
      %s93 = sphi 0, %s90
      %s94 = sphi 0, %s93
      %s110 = sphi 0, %s94
      %s118 = sphi 0, %s120
      %s121 = sphi 0, %s118
      %s122 = sphi 0, %s121
      %s138 = sphi 0, %s122
    $region4: #{frame_reduce_dim.1} parent=1 // loop_header_branch
      %19 = sbr.rel (%p17) target = $region8
    $region5: #{frame_reduce_dim.1} parent=1 // loop_body
      %s21 = ssub.s32 %s16, 1
      %s22 = ssub.s32 %s16, 2
      %s29 = sadd.s32 1, %s24
      %p30 = scmp.ge.s32.totalorder %s29, 2
      %s31 = scalar_select %p30, 0, %s29
      %s32 = sadd.s32 1, %s23
      %s33 = scalar_select %p30, %s32, %s23
      %p34 = scmp.ge.s32.totalorder %s33, 1
      %s35 = scalar_select %p34, 0, %s33
      %s36 = ssub.s32 %s23, %s35
      %p37 = scmp.eq.s32.totalorder %s36, 0
      %s39 = sadd.s32 %s38, 1
      %s40 = scalar_select %p37, %s38, %s39
      %p43 = pneg %p37
      %p44 = scmp.eq.s32.totalorder %s16, 1
      %p45 = por %p43, %p44
      %p46 = scmp.ne.s32.totalorder %s38, %s41
      %p47 = scmp.eq.s32.totalorder %s16, 0
      %p48 = por %p46, %p47
      %p49 = scmp.ne.s32.totalorder %s38, %s41
      %p50 = scmp.eq.s32.totalorder %s21, 1
      %p51 = por %p49, %p50
      %p52 = scmp.ne.s32.totalorder %s41, %s42
      %p53 = scmp.eq.s32.totalorder %s21, 0
      %p54 = por %p52, %p53
      %p55 = scmp.ne.s32.totalorder %s41, %s42
      %p56 = scmp.eq.s32.totalorder %s22, 1
      %p57 = por %p55, %p56
      %p59 = scmp.ne.s32.totalorder %s42, %s58
      %p60 = scmp.eq.s32.totalorder %s22, 0
      %p61 = por %p59, %p60
      %s62 = ssub.s32 %s24, %s31
      %p63 = scmp.eq.s32.totalorder %s62, 0
      %s65 = sadd.s32 %s64, 1
      %s66 = scalar_select %p63, %s64, %s65
      %p69 = pneg %p63
      %p70 = scmp.eq.s32.totalorder %s16, 1
      %p71 = por %p69, %p70
      %p72 = scmp.ne.s32.totalorder %s64, %s67
      %p73 = scmp.eq.s32.totalorder %s16, 0
      %p74 = por %p72, %p73
      %p75 = scmp.ne.s32.totalorder %s64, %s67
      %p76 = scmp.eq.s32.totalorder %s21, 1
      %p77 = por %p75, %p76
      %p78 = scmp.ne.s32.totalorder %s67, %s68
      %p79 = scmp.eq.s32.totalorder %s21, 0
      %p80 = por %p78, %p79
      %p81 = scmp.ne.s32.totalorder %s67, %s68
      %p82 = scmp.eq.s32.totalorder %s22, 1
      %p83 = por %p81, %p82
      %p85 = scmp.ne.s32.totalorder %s68, %s84
      %p86 = scmp.eq.s32.totalorder %s22, 0
      %p87 = por %p85, %p86
      %s88 = ssub.s32 %s24, %s31
      %p89 = scmp.eq.s32.totalorder %s88, 0
      %s91 = sadd.s32 %s90, 1
      %s92 = scalar_select %p89, %s90, %s91
      %p95 = pneg %p89
      %p96 = scmp.eq.s32.totalorder %s16, 1
      %p97 = por %p95, %p96
      %p98 = scmp.ne.s32.totalorder %s90, %s93
      %p99 = scmp.eq.s32.totalorder %s16, 0
      %p100 = por %p98, %p99
      %p101 = scmp.ne.s32.totalorder %s90, %s93
      %p102 = scmp.eq.s32.totalorder %s21, 1
      %p103 = por %p101, %p102
      %p104 = scmp.ne.s32.totalorder %s93, %s94
      %p105 = scmp.eq.s32.totalorder %s21, 0
      %p106 = por %p104, %p105
      %p107 = scmp.ne.s32.totalorder %s93, %s94
      %p108 = scmp.eq.s32.totalorder %s22, 1
      %p109 = por %p107, %p108
      %p111 = scmp.ne.s32.totalorder %s94, %s110
      %p112 = scmp.eq.s32.totalorder %s22, 0
      %p113 = por %p111, %p112
      %s114 = ssub.s32 %s23, %s35
      %s115 = ssub.s32 %s24, %s31
      %s116 = sor.u32 %s114, %s115
      %p117 = scmp.eq.s32.totalorder %s116, 0
      %s119 = sadd.s32 %s118, 1
      %s120 = scalar_select %p117, %s118, %s119
      %p123 = pneg %p117
      %p124 = scmp.eq.s32.totalorder %s16, 1
      %p125 = por %p123, %p124
      %p126 = scmp.ne.s32.totalorder %s118, %s121
      %p127 = scmp.eq.s32.totalorder %s16, 0
      %p128 = por %p126, %p127
      %p129 = scmp.ne.s32.totalorder %s118, %s121
      %p130 = scmp.eq.s32.totalorder %s21, 1
      %p131 = por %p129, %p130
      %p132 = scmp.ne.s32.totalorder %s121, %s122
      %p133 = scmp.eq.s32.totalorder %s21, 0
      %p134 = por %p132, %p133
      %p135 = scmp.ne.s32.totalorder %s121, %s122
      %p136 = scmp.eq.s32.totalorder %s22, 1
      %p137 = por %p135, %p136
      %p139 = scmp.ne.s32.totalorder %s122, %s138
      %p140 = scmp.eq.s32.totalorder %s22, 0
      %p141 = por %p139, %p140
      %p142 = scmp.le.s32.totalorder 1, %s16
      %p143 = scmp.lt.s32.totalorder %s16, 3
      %p144 = pnand %p142, %p143
      %p145 = pneg %p144
      // Predicated region
      $region9: #{frame_reduce_dim.1} parent=5 // pred_check
        _
      $region10: #{frame_reduce_dim.1} parent=5 // pred_check_branch
        %147 = sbr.rel (%p144) target = $region12
      $region11: #{frame_reduce_dim.1} parent=5 // pred_region
        %s148 = ssub.s32 %s16, 1
        // Predicated region
        $region13: #{frame_reduce_dim.1} parent=11 // pred_check
          %p149 = pneg %p54
        $region14: #{frame_reduce_dim.1} parent=11 // pred_check_branch
          %151 = sbr.rel (%p149) target = $region16
        $region15: #{frame_reduce_dim.1} parent=11 // pred_region
          %s152 = smul.u32 2, %s25
          %s154 = ssub.s32 4096, 4096
          %155 = vsyncadd [#allocation3], %s154
          %s156 = smul.addr %s152, 16
          %s157 = smul.addr %s156, 128
          %s158 = scalar_lea.hbm %s0, %s157
          %s159 = sshll.u32 [#allocation2], 4
          %s160 = int_to_ptr.vmem [resolvable:$true] %s159
          %165 = dma.hbm_to_vmem [thread:$0]  %s158, 4096, %s160, [#allocation3], 2048, 2048, 128
        $region16: #{frame_reduce_dim.1} parent=11 // pred_fallthru
          _
      $region12: #{frame_reduce_dim.1} parent=5 // pred_fallthru
        _
      %p166 = scmp.lt.s32.totalorder %s16, 2
      // Predicated region
      $region17: #{frame_reduce_dim.1} parent=5 // pred_check
        %p167 = pneg %p166
      $region18: #{frame_reduce_dim.1} parent=5 // pred_check_branch
        %169 = sbr.rel (%p167) target = $region20
      $region19: #{frame_reduce_dim.1} parent=5 // pred_region
        // Predicated region
        $region21: #{frame_reduce_dim.1} parent=19 // pred_check
          %p170 = pneg %p74
        $region22: #{frame_reduce_dim.1} parent=19 // pred_check_branch
          %172 = sbr.rel (%p170) target = $region24
        $region23: #{frame_reduce_dim.1} parent=19 // pred_region
          %s173 = sand.u32 %s16, 1
          %s174 = scalar_lea.sflag [#allocation6], %s173
          %s175 = sand.u32 %s64, 1
          %s176 = smul.addr %s175, 2048
          %s177 = scalar_lea.vmem [#allocation5], %s176
          %s178 = smul.u32 2, %s24
          %s180 = ssub.s32 32768, 32768
          %181 = vsyncadd %s174, %s180
          %s182 = smul.addr %s178, 64
          %s183 = scalar_lea.hbm %s1, %s182
          %s184 = sshll.u32 %s177, 4
          %s185 = int_to_ptr.vmem [resolvable:$true] %s184
          %190 = dma.hbm_to_vmem [thread:$0]  %s183, 32768, %s185, %s174, 256, 128, 8
        $region24: #{frame_reduce_dim.1} parent=19 // pred_fallthru
          _
        // Predicated region
        $region25: #{frame_reduce_dim.1} parent=19 // pred_check
          %p191 = pneg %p100
        $region26: #{frame_reduce_dim.1} parent=19 // pred_check_branch
          %193 = sbr.rel (%p191) target = $region28
        $region27: #{frame_reduce_dim.1} parent=19 // pred_region
          %s194 = sand.u32 %s16, 1
          %s195 = scalar_lea.sflag [#allocation6], %s194
          %s196 = sand.u32 %s90, 1
          %s197 = smul.addr %s196, 2
          %s198 = scalar_lea.vmem [#allocation7], %s197
          %s199 = smul.u32 2, %s24
          %s201 = ssub.s32 32, 32
          %202 = vsyncadd %s195, %s201
          %s203 = smul.addr %s199, 16
          %s204 = scalar_lea.hbm %s2, %s203
          %s206 = sshll.u32 %s198, 4
          %s207 = int_to_ptr.vmem [resolvable:$true] %s206
          %209 = dma.hbm_to_vmem [thread:$0]  %s204, 32, %s207, %s195
        $region28: #{frame_reduce_dim.1} parent=19 // pred_fallthru
          _
      $region20: #{frame_reduce_dim.1} parent=5 // pred_fallthru
        _
      %p210 = scmp.le.s32.totalorder 1, %s16
      %p211 = scmp.lt.s32.totalorder %s16, 3
      %p212 = pnand %p210, %p211
      %p213 = pneg %p212
      // Predicated region
      $region29: #{frame_reduce_dim.1} parent=5 // pred_check
        _
      $region30: #{frame_reduce_dim.1} parent=5 // pred_check_branch
        %215 = sbr.rel (%p212) target = $region32
      $region31: #{frame_reduce_dim.1} parent=5 // pred_region
        %s216 = ssub.s32 %s16, 1
        // Predicated region
        $region33: #{frame_reduce_dim.1} parent=31 // pred_check
          %p217 = pneg %p54
        $region34: #{frame_reduce_dim.1} parent=31 // pred_check_branch
          %219 = sbr.rel (%p217) target = $region36
        $region35: #{frame_reduce_dim.1} parent=31 // pred_region
          %220 = dma.done [#allocation3], 4096
        $region36: #{frame_reduce_dim.1} parent=31 // pred_fallthru
          _
        %s221 = sand.u32 %s21, 1
        %s222 = scalar_lea.sflag [#allocation6], %s221
        %s223 = sand.u32 %s67, 1
        %s224 = smul.addr %s223, 2048
        %s225 = scalar_lea.vmem [#allocation5], %s224
        // Predicated region
        $region37: #{frame_reduce_dim.1} parent=31 // pred_check
          %p226 = pneg %p80
        $region38: #{frame_reduce_dim.1} parent=31 // pred_check_branch
          %228 = sbr.rel (%p226) target = $region40
        $region39: #{frame_reduce_dim.1} parent=31 // pred_region
          %229 = dma.done %s222, 32768
        $region40: #{frame_reduce_dim.1} parent=31 // pred_fallthru
          _
        %s230 = sand.u32 %s21, 1
        %s231 = scalar_lea.sflag [#allocation6], %s230
        %s232 = sand.u32 %s93, 1
        %s233 = smul.addr %s232, 2
        %s234 = scalar_lea.vmem [#allocation7], %s233
        // Predicated region
        $region41: #{frame_reduce_dim.1} parent=31 // pred_check
          %p235 = pneg %p106
        $region42: #{frame_reduce_dim.1} parent=31 // pred_check_branch
          %237 = sbr.rel (%p235) target = $region44
        $region43: #{frame_reduce_dim.1} parent=31 // pred_region
          %238 = dma.done %s231, 32
        $region44: #{frame_reduce_dim.1} parent=31 // pred_fallthru
          _
        %p239 = pneg %p54
        %p240 = pneg %p51
        %s241 = sand.u32 %s21, 1
        %s242 = scalar_lea.sflag [#allocation6], %s241
        %s243 = sand.u32 %s67, 1
        %s244 = smul.addr %s243, 2048
        %s245 = scalar_lea.vmem [#allocation5], %s244
        %p246 = pneg %p80
        %p247 = pneg %p77
        %s248 = sand.u32 %s21, 1
        %s249 = scalar_lea.sflag [#allocation6], %s248
        %s250 = sand.u32 %s93, 1
        %s251 = smul.addr %s250, 2
        %s252 = scalar_lea.vmem [#allocation7], %s251
        %p253 = pneg %p106
        %p254 = pneg %p103
        %p255 = pneg %p134
        %p256 = pneg %p131
        %s257 = sand.u32 %s121, 1
        %s258 = scalar_lea.sflag [#allocation4], %s257
        %s259 = sand.u32 %s121, 1
        %s260 = smul.addr %s259, 32
        %s261 = scalar_lea.vmem [#allocation8], %s260
        %s262 = smul.u32 2, %s25
        %s263 = smul.u32 2, %s26
        %s264 = smul.u32 2, %s26
        %s265 = smul.u32 2, %s25
        %s266 = smul.u32 2, %s26
        %v267 = vld [vmem:[#allocation2] sm:$0xff]
        %v268 = vld [vmem:[#allocation2 + $0x8] sm:$0xff]
        %v269 = vld [vmem:[#allocation2 + $0x10] sm:$0xff]
        %v270 = vld [vmem:[#allocation2 + $0x18] sm:$0xff]
        %v271 = vld [vmem:[#allocation2 + $0x20] sm:$0xff]
        %v272 = vld [vmem:[#allocation2 + $0x28] sm:$0xff]
        %v273 = vld [vmem:[#allocation2 + $0x30] sm:$0xff]
        %v274 = vld [vmem:[#allocation2 + $0x38] sm:$0xff]
        %v275 = vld [vmem:[#allocation2 + $0x40] sm:$0xff]
        %v276 = vld [vmem:[#allocation2 + $0x48] sm:$0xff]
        %v277 = vld [vmem:[#allocation2 + $0x50] sm:$0xff]
        %v278 = vld [vmem:[#allocation2 + $0x58] sm:$0xff]
        %v279 = vld [vmem:[#allocation2 + $0x60] sm:$0xff]
        %v280 = vld [vmem:[#allocation2 + $0x68] sm:$0xff]
        %v281 = vld [vmem:[#allocation2 + $0x70] sm:$0xff]
        %v282 = vld [vmem:[#allocation2 + $0x78] sm:$0xff]
        %v283 = vld [vmem:[#allocation2 + $0x80] sm:$0xff]
        %v284 = vld [vmem:[#allocation2 + $0x88] sm:$0xff]
        %v285 = vld [vmem:[#allocation2 + $0x90] sm:$0xff]
        %v286 = vld [vmem:[#allocation2 + $0x98] sm:$0xff]
        %v287 = vld [vmem:[#allocation2 + $0xa0] sm:$0xff]
        %v288 = vld [vmem:[#allocation2 + $0xa8] sm:$0xff]
        %v289 = vld [vmem:[#allocation2 + $0xb0] sm:$0xff]
        %v290 = vld [vmem:[#allocation2 + $0xb8] sm:$0xff]
        %v291 = vld [vmem:[#allocation2 + $0xc0] sm:$0xff]
        %v292 = vld [vmem:[#allocation2 + $0xc8] sm:$0xff]
        %v293 = vld [vmem:[#allocation2 + $0xd0] sm:$0xff]
        %v294 = vld [vmem:[#allocation2 + $0xd8] sm:$0xff]
        %v295 = vld [vmem:[#allocation2 + $0xe0] sm:$0xff]
        %v296 = vld [vmem:[#allocation2 + $0xe8] sm:$0xff]
        %v297 = vld [vmem:[#allocation2 + $0xf0] sm:$0xff]
        %v298 = vld [vmem:[#allocation2 + $0xf8] sm:$0xff]
        %v299 = vpack.c.bf16 %v283, %v267
        %v300 = vpack.c.bf16 %v284, %v268
        %v301 = vpack.c.bf16 %v285, %v269
        %v302 = vpack.c.bf16 %v286, %v270
        %v303 = vpack.c.bf16 %v287, %v271
        %v304 = vpack.c.bf16 %v288, %v272
        %v305 = vpack.c.bf16 %v289, %v273
        %v306 = vpack.c.bf16 %v290, %v274
        %v307 = vpack.c.bf16 %v291, %v275
        %v308 = vpack.c.bf16 %v292, %v276
        %v309 = vpack.c.bf16 %v293, %v277
        %v310 = vpack.c.bf16 %v294, %v278
        %v311 = vpack.c.bf16 %v295, %v279
        %v312 = vpack.c.bf16 %v296, %v280
        %v313 = vpack.c.bf16 %v297, %v281
        %v314 = vpack.c.bf16 %v298, %v282
        %v315 = vld [vmem:[%s225] sm:$0xff]
        %v316 = vld [vmem:[%s225 + $0x8] sm:$0xff]
        %v317 = vld [vmem:[%s225 + $0x10] sm:$0xff]
        %v318 = vld [vmem:[%s225 + $0x18] sm:$0xff]
        %v319 = vld [vmem:[%s225 + $0x20] sm:$0xff]
        %v320 = vld [vmem:[%s225 + $0x28] sm:$0xff]
        %v321 = vld [vmem:[%s225 + $0x30] sm:$0xff]
        %v322 = vld [vmem:[%s225 + $0x38] sm:$0xff]
        %v323 = vld [vmem:[%s225 + $0x40] sm:$0xff]
        %v324 = vld [vmem:[%s225 + $0x48] sm:$0xff]
        %v325 = vld [vmem:[%s225 + $0x50] sm:$0xff]
        %v326 = vld [vmem:[%s225 + $0x58] sm:$0xff]
        %v327 = vld [vmem:[%s225 + $0x60] sm:$0xff]
        %v328 = vld [vmem:[%s225 + $0x68] sm:$0xff]
        %v329 = vld [vmem:[%s225 + $0x70] sm:$0xff]
        %v330 = vld [vmem:[%s225 + $0x78] sm:$0xff]
        %v331 = vld [vmem:[%s225 + $0x80] sm:$0xff]
        %v332 = vld [vmem:[%s225 + $0x88] sm:$0xff]
        %v333 = vld [vmem:[%s225 + $0x90] sm:$0xff]
        %v334 = vld [vmem:[%s225 + $0x98] sm:$0xff]
        %v335 = vld [vmem:[%s225 + $0xa0] sm:$0xff]
        %v336 = vld [vmem:[%s225 + $0xa8] sm:$0xff]
        %v337 = vld [vmem:[%s225 + $0xb0] sm:$0xff]
        %v338 = vld [vmem:[%s225 + $0xb8] sm:$0xff]
        %v339 = vld [vmem:[%s225 + $0xc0] sm:$0xff]
        %v340 = vld [vmem:[%s225 + $0xc8] sm:$0xff]
        %v341 = vld [vmem:[%s225 + $0xd0] sm:$0xff]
        %v342 = vld [vmem:[%s225 + $0xd8] sm:$0xff]
        %v343 = vld [vmem:[%s225 + $0xe0] sm:$0xff]
        %v344 = vld [vmem:[%s225 + $0xe8] sm:$0xff]
        %v345 = vld [vmem:[%s225 + $0xf0] sm:$0xff]
        %v346 = vld [vmem:[%s225 + $0xf8] sm:$0xff]
        %v347 = vld [vmem:[%s225 + $0x100] sm:$0xff]
        %v348 = vld [vmem:[%s225 + $0x108] sm:$0xff]
        %v349 = vld [vmem:[%s225 + $0x110] sm:$0xff]
        %v350 = vld [vmem:[%s225 + $0x118] sm:$0xff]
        %v351 = vld [vmem:[%s225 + $0x120] sm:$0xff]
        %v352 = vld [vmem:[%s225 + $0x128] sm:$0xff]
        %v353 = vld [vmem:[%s225 + $0x130] sm:$0xff]
        %v354 = vld [vmem:[%s225 + $0x138] sm:$0xff]
        %v355 = vld [vmem:[%s225 + $0x140] sm:$0xff]
        %v356 = vld [vmem:[%s225 + $0x148] sm:$0xff]
        %v357 = vld [vmem:[%s225 + $0x150] sm:$0xff]
        %v358 = vld [vmem:[%s225 + $0x158] sm:$0xff]
        %v359 = vld [vmem:[%s225 + $0x160] sm:$0xff]
        %v360 = vld [vmem:[%s225 + $0x168] sm:$0xff]
        %v361 = vld [vmem:[%s225 + $0x170] sm:$0xff]
        %v362 = vld [vmem:[%s225 + $0x178] sm:$0xff]
        %v363 = vld [vmem:[%s225 + $0x180] sm:$0xff]
        %v364 = vld [vmem:[%s225 + $0x188] sm:$0xff]
        %v365 = vld [vmem:[%s225 + $0x190] sm:$0xff]
        %v366 = vld [vmem:[%s225 + $0x198] sm:$0xff]
        %v367 = vld [vmem:[%s225 + $0x1a0] sm:$0xff]
        %v368 = vld [vmem:[%s225 + $0x1a8] sm:$0xff]
        %v369 = vld [vmem:[%s225 + $0x1b0] sm:$0xff]
        %v370 = vld [vmem:[%s225 + $0x1b8] sm:$0xff]
        %v371 = vld [vmem:[%s225 + $0x1c0] sm:$0xff]
        %v372 = vld [vmem:[%s225 + $0x1c8] sm:$0xff]
        %v373 = vld [vmem:[%s225 + $0x1d0] sm:$0xff]
        %v374 = vld [vmem:[%s225 + $0x1d8] sm:$0xff]
        %v375 = vld [vmem:[%s225 + $0x1e0] sm:$0xff]
        %v376 = vld [vmem:[%s225 + $0x1e8] sm:$0xff]
        %v377 = vld [vmem:[%s225 + $0x1f0] sm:$0xff]
        %v378 = vld [vmem:[%s225 + $0x1f8] sm:$0xff]
        %v379 = vld [vmem:[%s225 + $0x200] sm:$0xff]
        %v380 = vld [vmem:[%s225 + $0x208] sm:$0xff]
        %v381 = vld [vmem:[%s225 + $0x210] sm:$0xff]
        %v382 = vld [vmem:[%s225 + $0x218] sm:$0xff]
        %v383 = vld [vmem:[%s225 + $0x220] sm:$0xff]
        %v384 = vld [vmem:[%s225 + $0x228] sm:$0xff]
        %v385 = vld [vmem:[%s225 + $0x230] sm:$0xff]
        %v386 = vld [vmem:[%s225 + $0x238] sm:$0xff]
        %v387 = vld [vmem:[%s225 + $0x240] sm:$0xff]
        %v388 = vld [vmem:[%s225 + $0x248] sm:$0xff]
        %v389 = vld [vmem:[%s225 + $0x250] sm:$0xff]
        %v390 = vld [vmem:[%s225 + $0x258] sm:$0xff]
        %v391 = vld [vmem:[%s225 + $0x260] sm:$0xff]
        %v392 = vld [vmem:[%s225 + $0x268] sm:$0xff]
        %v393 = vld [vmem:[%s225 + $0x270] sm:$0xff]
        %v394 = vld [vmem:[%s225 + $0x278] sm:$0xff]
        %v395 = vld [vmem:[%s225 + $0x280] sm:$0xff]
        %v396 = vld [vmem:[%s225 + $0x288] sm:$0xff]
        %v397 = vld [vmem:[%s225 + $0x290] sm:$0xff]
        %v398 = vld [vmem:[%s225 + $0x298] sm:$0xff]
        %v399 = vld [vmem:[%s225 + $0x2a0] sm:$0xff]
        %v400 = vld [vmem:[%s225 + $0x2a8] sm:$0xff]
        %v401 = vld [vmem:[%s225 + $0x2b0] sm:$0xff]
        %v402 = vld [vmem:[%s225 + $0x2b8] sm:$0xff]
        %v403 = vld [vmem:[%s225 + $0x2c0] sm:$0xff]
        %v404 = vld [vmem:[%s225 + $0x2c8] sm:$0xff]
        %v405 = vld [vmem:[%s225 + $0x2d0] sm:$0xff]
        %v406 = vld [vmem:[%s225 + $0x2d8] sm:$0xff]
        %v407 = vld [vmem:[%s225 + $0x2e0] sm:$0xff]
        %v408 = vld [vmem:[%s225 + $0x2e8] sm:$0xff]
        %v409 = vld [vmem:[%s225 + $0x2f0] sm:$0xff]
        %v410 = vld [vmem:[%s225 + $0x2f8] sm:$0xff]
        %v411 = vld [vmem:[%s225 + $0x300] sm:$0xff]
        %v412 = vld [vmem:[%s225 + $0x308] sm:$0xff]
        %v413 = vld [vmem:[%s225 + $0x310] sm:$0xff]
        %v414 = vld [vmem:[%s225 + $0x318] sm:$0xff]
        %v415 = vld [vmem:[%s225 + $0x320] sm:$0xff]
        %v416 = vld [vmem:[%s225 + $0x328] sm:$0xff]
        %v417 = vld [vmem:[%s225 + $0x330] sm:$0xff]
        %v418 = vld [vmem:[%s225 + $0x338] sm:$0xff]
        %v419 = vld [vmem:[%s225 + $0x340] sm:$0xff]
        %v420 = vld [vmem:[%s225 + $0x348] sm:$0xff]
        %v421 = vld [vmem:[%s225 + $0x350] sm:$0xff]
        %v422 = vld [vmem:[%s225 + $0x358] sm:$0xff]
        %v423 = vld [vmem:[%s225 + $0x360] sm:$0xff]
        %v424 = vld [vmem:[%s225 + $0x368] sm:$0xff]
        %v425 = vld [vmem:[%s225 + $0x370] sm:$0xff]
        %v426 = vld [vmem:[%s225 + $0x378] sm:$0xff]
        %v427 = vld [vmem:[%s225 + $0x380] sm:$0xff]
        %v428 = vld [vmem:[%s225 + $0x388] sm:$0xff]
        %v429 = vld [vmem:[%s225 + $0x390] sm:$0xff]
        %v430 = vld [vmem:[%s225 + $0x398] sm:$0xff]
        %v431 = vld [vmem:[%s225 + $0x3a0] sm:$0xff]
        %v432 = vld [vmem:[%s225 + $0x3a8] sm:$0xff]
        %v433 = vld [vmem:[%s225 + $0x3b0] sm:$0xff]
        %v434 = vld [vmem:[%s225 + $0x3b8] sm:$0xff]
        %v435 = vld [vmem:[%s225 + $0x3c0] sm:$0xff]
        %v436 = vld [vmem:[%s225 + $0x3c8] sm:$0xff]
        %v437 = vld [vmem:[%s225 + $0x3d0] sm:$0xff]
        %v438 = vld [vmem:[%s225 + $0x3d8] sm:$0xff]
        %v439 = vld [vmem:[%s225 + $0x3e0] sm:$0xff]
        %v440 = vld [vmem:[%s225 + $0x3e8] sm:$0xff]
        %v441 = vld [vmem:[%s225 + $0x3f0] sm:$0xff]
        %v442 = vld [vmem:[%s225 + $0x3f8] sm:$0xff]
        %v443 = vld [vmem:[%s225 + $0x400] sm:$0xff]
        %v444 = vld [vmem:[%s225 + $0x408] sm:$0xff]
        %v445 = vld [vmem:[%s225 + $0x410] sm:$0xff]
        %v446 = vld [vmem:[%s225 + $0x418] sm:$0xff]
        %v447 = vld [vmem:[%s225 + $0x420] sm:$0xff]
        %v448 = vld [vmem:[%s225 + $0x428] sm:$0xff]
        %v449 = vld [vmem:[%s225 + $0x430] sm:$0xff]
        %v450 = vld [vmem:[%s225 + $0x438] sm:$0xff]
        %v451 = vld [vmem:[%s225 + $0x440] sm:$0xff]
        %v452 = vld [vmem:[%s225 + $0x448] sm:$0xff]
        %v453 = vld [vmem:[%s225 + $0x450] sm:$0xff]
        %v454 = vld [vmem:[%s225 + $0x458] sm:$0xff]
        %v455 = vld [vmem:[%s225 + $0x460] sm:$0xff]
        %v456 = vld [vmem:[%s225 + $0x468] sm:$0xff]
        %v457 = vld [vmem:[%s225 + $0x470] sm:$0xff]
        %v458 = vld [vmem:[%s225 + $0x478] sm:$0xff]
        %v459 = vld [vmem:[%s225 + $0x480] sm:$0xff]
        %v460 = vld [vmem:[%s225 + $0x488] sm:$0xff]
        %v461 = vld [vmem:[%s225 + $0x490] sm:$0xff]
        %v462 = vld [vmem:[%s225 + $0x498] sm:$0xff]
        %v463 = vld [vmem:[%s225 + $0x4a0] sm:$0xff]
        %v464 = vld [vmem:[%s225 + $0x4a8] sm:$0xff]
        %v465 = vld [vmem:[%s225 + $0x4b0] sm:$0xff]
        %v466 = vld [vmem:[%s225 + $0x4b8] sm:$0xff]
        %v467 = vld [vmem:[%s225 + $0x4c0] sm:$0xff]
        %v468 = vld [vmem:[%s225 + $0x4c8] sm:$0xff]
        %v469 = vld [vmem:[%s225 + $0x4d0] sm:$0xff]
        %v470 = vld [vmem:[%s225 + $0x4d8] sm:$0xff]
        %v471 = vld [vmem:[%s225 + $0x4e0] sm:$0xff]
        %v472 = vld [vmem:[%s225 + $0x4e8] sm:$0xff]
        %v473 = vld [vmem:[%s225 + $0x4f0] sm:$0xff]
        %v474 = vld [vmem:[%s225 + $0x4f8] sm:$0xff]
        %v475 = vld [vmem:[%s225 + $0x500] sm:$0xff]
        %v476 = vld [vmem:[%s225 + $0x508] sm:$0xff]
        %v477 = vld [vmem:[%s225 + $0x510] sm:$0xff]
        %v478 = vld [vmem:[%s225 + $0x518] sm:$0xff]
        %v479 = vld [vmem:[%s225 + $0x520] sm:$0xff]
        %v480 = vld [vmem:[%s225 + $0x528] sm:$0xff]
        %v481 = vld [vmem:[%s225 + $0x530] sm:$0xff]
        %v482 = vld [vmem:[%s225 + $0x538] sm:$0xff]
        %v483 = vld [vmem:[%s225 + $0x540] sm:$0xff]
        %v484 = vld [vmem:[%s225 + $0x548] sm:$0xff]
        %v485 = vld [vmem:[%s225 + $0x550] sm:$0xff]
        %v486 = vld [vmem:[%s225 + $0x558] sm:$0xff]
        %v487 = vld [vmem:[%s225 + $0x560] sm:$0xff]
        %v488 = vld [vmem:[%s225 + $0x568] sm:$0xff]
        %v489 = vld [vmem:[%s225 + $0x570] sm:$0xff]
        %v490 = vld [vmem:[%s225 + $0x578] sm:$0xff]
        %v491 = vld [vmem:[%s225 + $0x580] sm:$0xff]
        %v492 = vld [vmem:[%s225 + $0x588] sm:$0xff]
        %v493 = vld [vmem:[%s225 + $0x590] sm:$0xff]
        %v494 = vld [vmem:[%s225 + $0x598] sm:$0xff]
        %v495 = vld [vmem:[%s225 + $0x5a0] sm:$0xff]
        %v496 = vld [vmem:[%s225 + $0x5a8] sm:$0xff]
        %v497 = vld [vmem:[%s225 + $0x5b0] sm:$0xff]
        %v498 = vld [vmem:[%s225 + $0x5b8] sm:$0xff]
        %v499 = vld [vmem:[%s225 + $0x5c0] sm:$0xff]
        %v500 = vld [vmem:[%s225 + $0x5c8] sm:$0xff]
        %v501 = vld [vmem:[%s225 + $0x5d0] sm:$0xff]
        %v502 = vld [vmem:[%s225 + $0x5d8] sm:$0xff]
        %v503 = vld [vmem:[%s225 + $0x5e0] sm:$0xff]
        %v504 = vld [vmem:[%s225 + $0x5e8] sm:$0xff]
        %v505 = vld [vmem:[%s225 + $0x5f0] sm:$0xff]
        %v506 = vld [vmem:[%s225 + $0x5f8] sm:$0xff]
        %v507 = vld [vmem:[%s225 + $0x600] sm:$0xff]
        %v508 = vld [vmem:[%s225 + $0x608] sm:$0xff]
        %v509 = vld [vmem:[%s225 + $0x610] sm:$0xff]
        %v510 = vld [vmem:[%s225 + $0x618] sm:$0xff]
        %v511 = vld [vmem:[%s225 + $0x620] sm:$0xff]
        %v512 = vld [vmem:[%s225 + $0x628] sm:$0xff]
        %v513 = vld [vmem:[%s225 + $0x630] sm:$0xff]
        %v514 = vld [vmem:[%s225 + $0x638] sm:$0xff]
        %v515 = vld [vmem:[%s225 + $0x640] sm:$0xff]
        %v516 = vld [vmem:[%s225 + $0x648] sm:$0xff]
        %v517 = vld [vmem:[%s225 + $0x650] sm:$0xff]
        %v518 = vld [vmem:[%s225 + $0x658] sm:$0xff]
        %v519 = vld [vmem:[%s225 + $0x660] sm:$0xff]
        %v520 = vld [vmem:[%s225 + $0x668] sm:$0xff]
        %v521 = vld [vmem:[%s225 + $0x670] sm:$0xff]
        %v522 = vld [vmem:[%s225 + $0x678] sm:$0xff]
        %v523 = vld [vmem:[%s225 + $0x680] sm:$0xff]
        %v524 = vld [vmem:[%s225 + $0x688] sm:$0xff]
        %v525 = vld [vmem:[%s225 + $0x690] sm:$0xff]
        %v526 = vld [vmem:[%s225 + $0x698] sm:$0xff]
        %v527 = vld [vmem:[%s225 + $0x6a0] sm:$0xff]
        %v528 = vld [vmem:[%s225 + $0x6a8] sm:$0xff]
        %v529 = vld [vmem:[%s225 + $0x6b0] sm:$0xff]
        %v530 = vld [vmem:[%s225 + $0x6b8] sm:$0xff]
        %v531 = vld [vmem:[%s225 + $0x6c0] sm:$0xff]
        %v532 = vld [vmem:[%s225 + $0x6c8] sm:$0xff]
        %v533 = vld [vmem:[%s225 + $0x6d0] sm:$0xff]
        %v534 = vld [vmem:[%s225 + $0x6d8] sm:$0xff]
        %v535 = vld [vmem:[%s225 + $0x6e0] sm:$0xff]
        %v536 = vld [vmem:[%s225 + $0x6e8] sm:$0xff]
        %v537 = vld [vmem:[%s225 + $0x6f0] sm:$0xff]
        %v538 = vld [vmem:[%s225 + $0x6f8] sm:$0xff]
        %v539 = vld [vmem:[%s225 + $0x700] sm:$0xff]
        %v540 = vld [vmem:[%s225 + $0x708] sm:$0xff]
        %v541 = vld [vmem:[%s225 + $0x710] sm:$0xff]
        %v542 = vld [vmem:[%s225 + $0x718] sm:$0xff]
        %v543 = vld [vmem:[%s225 + $0x720] sm:$0xff]
        %v544 = vld [vmem:[%s225 + $0x728] sm:$0xff]
        %v545 = vld [vmem:[%s225 + $0x730] sm:$0xff]
        %v546 = vld [vmem:[%s225 + $0x738] sm:$0xff]
        %v547 = vld [vmem:[%s225 + $0x740] sm:$0xff]
        %v548 = vld [vmem:[%s225 + $0x748] sm:$0xff]
        %v549 = vld [vmem:[%s225 + $0x750] sm:$0xff]
        %v550 = vld [vmem:[%s225 + $0x758] sm:$0xff]
        %v551 = vld [vmem:[%s225 + $0x760] sm:$0xff]
        %v552 = vld [vmem:[%s225 + $0x768] sm:$0xff]
        %v553 = vld [vmem:[%s225 + $0x770] sm:$0xff]
        %v554 = vld [vmem:[%s225 + $0x778] sm:$0xff]
        %v555 = vld [vmem:[%s225 + $0x780] sm:$0xff]
        %v556 = vld [vmem:[%s225 + $0x788] sm:$0xff]
        %v557 = vld [vmem:[%s225 + $0x790] sm:$0xff]
        %v558 = vld [vmem:[%s225 + $0x798] sm:$0xff]
        %v559 = vld [vmem:[%s225 + $0x7a0] sm:$0xff]
        %v560 = vld [vmem:[%s225 + $0x7a8] sm:$0xff]
        %v561 = vld [vmem:[%s225 + $0x7b0] sm:$0xff]
        %v562 = vld [vmem:[%s225 + $0x7b8] sm:$0xff]
        %v563 = vld [vmem:[%s225 + $0x7c0] sm:$0xff]
        %v564 = vld [vmem:[%s225 + $0x7c8] sm:$0xff]
        %v565 = vld [vmem:[%s225 + $0x7d0] sm:$0xff]
        %v566 = vld [vmem:[%s225 + $0x7d8] sm:$0xff]
        %v567 = vld [vmem:[%s225 + $0x7e0] sm:$0xff]
        %v568 = vld [vmem:[%s225 + $0x7e8] sm:$0xff]
        %v569 = vld [vmem:[%s225 + $0x7f0] sm:$0xff]
        %v570 = vld [vmem:[%s225 + $0x7f8] sm:$0xff]
        %v571 = vld [vmem:[%s234] sm:$0x3]
        %v573 = vlaneseq
        %v574 = vshrl.u32 %v573, 7
        %v575 = vsub.s32 0, %v574
        %v576 = vrot.slane %v571, %v575
        %v577 = vlaneseq
        %v578 = vshrl.u32 %v577, 7
        %v579 = vsub.s32 1, %v578
        %v580 = vrot.slane %v571, %v579
        %v839 = vunpack.c.l.b16 %v315
        %v840 = vunpack.c.h.b16 %v315
        %v841 = vunpack.c.l.b16 %v316
        %v842 = vunpack.c.h.b16 %v316
        %v843 = vunpack.c.l.b16 %v317
        %v844 = vunpack.c.h.b16 %v317
        %v845 = vunpack.c.l.b16 %v318
        %v846 = vunpack.c.h.b16 %v318
        %v847 = vunpack.c.l.b16 %v319
        %v848 = vunpack.c.h.b16 %v319
        %v849 = vunpack.c.l.b16 %v320
        %v850 = vunpack.c.h.b16 %v320
        %v851 = vunpack.c.l.b16 %v321
        %v852 = vunpack.c.h.b16 %v321
        %v853 = vunpack.c.l.b16 %v322
        %v854 = vunpack.c.h.b16 %v322
        %v855 = vunpack.c.l.b16 %v323
        %v856 = vunpack.c.h.b16 %v323
        %v857 = vunpack.c.l.b16 %v324
        %v858 = vunpack.c.h.b16 %v324
        %v859 = vunpack.c.l.b16 %v325
        %v860 = vunpack.c.h.b16 %v325
        %v861 = vunpack.c.l.b16 %v326
        %v862 = vunpack.c.h.b16 %v326
        %v863 = vunpack.c.l.b16 %v327
        %v864 = vunpack.c.h.b16 %v327
        %v865 = vunpack.c.l.b16 %v328
        %v866 = vunpack.c.h.b16 %v328
        %v867 = vunpack.c.l.b16 %v329
        %v868 = vunpack.c.h.b16 %v329
        %v869 = vunpack.c.l.b16 %v330
        %v870 = vunpack.c.h.b16 %v330
        %v871 = vunpack.c.l.b16 %v331
        %v872 = vunpack.c.h.b16 %v331
        %v873 = vunpack.c.l.b16 %v332
        %v874 = vunpack.c.h.b16 %v332
        %v875 = vunpack.c.l.b16 %v333
        %v876 = vunpack.c.h.b16 %v333
        %v877 = vunpack.c.l.b16 %v334
        %v878 = vunpack.c.h.b16 %v334
        %v879 = vunpack.c.l.b16 %v335
        %v880 = vunpack.c.h.b16 %v335
        %v881 = vunpack.c.l.b16 %v336
        %v882 = vunpack.c.h.b16 %v336
        %v883 = vunpack.c.l.b16 %v337
        %v884 = vunpack.c.h.b16 %v337
        %v885 = vunpack.c.l.b16 %v338
        %v886 = vunpack.c.h.b16 %v338
        %v887 = vunpack.c.l.b16 %v339
        %v888 = vunpack.c.h.b16 %v339
        %v889 = vunpack.c.l.b16 %v340
        %v890 = vunpack.c.h.b16 %v340
        %v891 = vunpack.c.l.b16 %v341
        %v892 = vunpack.c.h.b16 %v341
        %v893 = vunpack.c.l.b16 %v342
        %v894 = vunpack.c.h.b16 %v342
        %v895 = vunpack.c.l.b16 %v343
        %v896 = vunpack.c.h.b16 %v343
        %v897 = vunpack.c.l.b16 %v344
        %v898 = vunpack.c.h.b16 %v344
        %v899 = vunpack.c.l.b16 %v345
        %v900 = vunpack.c.h.b16 %v345
        %v901 = vunpack.c.l.b16 %v346
        %v902 = vunpack.c.h.b16 %v346
        %v903 = vunpack.c.l.b16 %v347
        %v904 = vunpack.c.h.b16 %v347
        %v905 = vunpack.c.l.b16 %v348
        %v906 = vunpack.c.h.b16 %v348
        %v907 = vunpack.c.l.b16 %v349
        %v908 = vunpack.c.h.b16 %v349
        %v909 = vunpack.c.l.b16 %v350
        %v910 = vunpack.c.h.b16 %v350
        %v911 = vunpack.c.l.b16 %v351
        %v912 = vunpack.c.h.b16 %v351
        %v913 = vunpack.c.l.b16 %v352
        %v914 = vunpack.c.h.b16 %v352
        %v915 = vunpack.c.l.b16 %v353
        %v916 = vunpack.c.h.b16 %v353
        %v917 = vunpack.c.l.b16 %v354
        %v918 = vunpack.c.h.b16 %v354
        %v919 = vunpack.c.l.b16 %v355
        %v920 = vunpack.c.h.b16 %v355
        %v921 = vunpack.c.l.b16 %v356
        %v922 = vunpack.c.h.b16 %v356
        %v923 = vunpack.c.l.b16 %v357
        %v924 = vunpack.c.h.b16 %v357
        %v925 = vunpack.c.l.b16 %v358
        %v926 = vunpack.c.h.b16 %v358
        %v927 = vunpack.c.l.b16 %v359
        %v928 = vunpack.c.h.b16 %v359
        %v929 = vunpack.c.l.b16 %v360
        %v930 = vunpack.c.h.b16 %v360
        %v931 = vunpack.c.l.b16 %v361
        %v932 = vunpack.c.h.b16 %v361
        %v933 = vunpack.c.l.b16 %v362
        %v934 = vunpack.c.h.b16 %v362
        %v935 = vunpack.c.l.b16 %v363
        %v936 = vunpack.c.h.b16 %v363
        %v937 = vunpack.c.l.b16 %v364
        %v938 = vunpack.c.h.b16 %v364
        %v939 = vunpack.c.l.b16 %v365
        %v940 = vunpack.c.h.b16 %v365
        %v941 = vunpack.c.l.b16 %v366
        %v942 = vunpack.c.h.b16 %v366
        %v943 = vunpack.c.l.b16 %v367
        %v944 = vunpack.c.h.b16 %v367
        %v945 = vunpack.c.l.b16 %v368
        %v946 = vunpack.c.h.b16 %v368
        %v947 = vunpack.c.l.b16 %v369
        %v948 = vunpack.c.h.b16 %v369
        %v949 = vunpack.c.l.b16 %v370
        %v950 = vunpack.c.h.b16 %v370
        %v951 = vunpack.c.l.b16 %v371
        %v952 = vunpack.c.h.b16 %v371
        %v953 = vunpack.c.l.b16 %v372
        %v954 = vunpack.c.h.b16 %v372
        %v955 = vunpack.c.l.b16 %v373
        %v956 = vunpack.c.h.b16 %v373
        %v957 = vunpack.c.l.b16 %v374
        %v958 = vunpack.c.h.b16 %v374
        %v959 = vunpack.c.l.b16 %v375
        %v960 = vunpack.c.h.b16 %v375
        %v961 = vunpack.c.l.b16 %v376
        %v962 = vunpack.c.h.b16 %v376
        %v963 = vunpack.c.l.b16 %v377
        %v964 = vunpack.c.h.b16 %v377
        %v965 = vunpack.c.l.b16 %v378
        %v966 = vunpack.c.h.b16 %v378
        %v967 = vunpack.c.l.b16 %v379
        %v968 = vunpack.c.h.b16 %v379
        %v969 = vunpack.c.l.b16 %v380
        %v970 = vunpack.c.h.b16 %v380
        %v971 = vunpack.c.l.b16 %v381
        %v972 = vunpack.c.h.b16 %v381
        %v973 = vunpack.c.l.b16 %v382
        %v974 = vunpack.c.h.b16 %v382
        %v975 = vunpack.c.l.b16 %v383
        %v976 = vunpack.c.h.b16 %v383
        %v977 = vunpack.c.l.b16 %v384
        %v978 = vunpack.c.h.b16 %v384
        %v979 = vunpack.c.l.b16 %v385
        %v980 = vunpack.c.h.b16 %v385
        %v981 = vunpack.c.l.b16 %v386
        %v982 = vunpack.c.h.b16 %v386
        %v983 = vunpack.c.l.b16 %v387
        %v984 = vunpack.c.h.b16 %v387
        %v985 = vunpack.c.l.b16 %v388
        %v986 = vunpack.c.h.b16 %v388
        %v987 = vunpack.c.l.b16 %v389
        %v988 = vunpack.c.h.b16 %v389
        %v989 = vunpack.c.l.b16 %v390
        %v990 = vunpack.c.h.b16 %v390
        %v991 = vunpack.c.l.b16 %v391
        %v992 = vunpack.c.h.b16 %v391
        %v993 = vunpack.c.l.b16 %v392
        %v994 = vunpack.c.h.b16 %v392
        %v995 = vunpack.c.l.b16 %v393
        %v996 = vunpack.c.h.b16 %v393
        %v997 = vunpack.c.l.b16 %v394
        %v998 = vunpack.c.h.b16 %v394
        %v999 = vunpack.c.l.b16 %v395
        %v1000 = vunpack.c.h.b16 %v395
        %v1001 = vunpack.c.l.b16 %v396
        %v1002 = vunpack.c.h.b16 %v396
        %v1003 = vunpack.c.l.b16 %v397
        %v1004 = vunpack.c.h.b16 %v397
        %v1005 = vunpack.c.l.b16 %v398
        %v1006 = vunpack.c.h.b16 %v398
        %v1007 = vunpack.c.l.b16 %v399
        %v1008 = vunpack.c.h.b16 %v399
        %v1009 = vunpack.c.l.b16 %v400
        %v1010 = vunpack.c.h.b16 %v400
        %v1011 = vunpack.c.l.b16 %v401
        %v1012 = vunpack.c.h.b16 %v401
        %v1013 = vunpack.c.l.b16 %v402
        %v1014 = vunpack.c.h.b16 %v402
        %v1015 = vunpack.c.l.b16 %v403
        %v1016 = vunpack.c.h.b16 %v403
        %v1017 = vunpack.c.l.b16 %v404
        %v1018 = vunpack.c.h.b16 %v404
        %v1019 = vunpack.c.l.b16 %v405
        %v1020 = vunpack.c.h.b16 %v405
        %v1021 = vunpack.c.l.b16 %v406
        %v1022 = vunpack.c.h.b16 %v406
        %v1023 = vunpack.c.l.b16 %v407
        %v1024 = vunpack.c.h.b16 %v407
        %v1025 = vunpack.c.l.b16 %v408
        %v1026 = vunpack.c.h.b16 %v408
        %v1027 = vunpack.c.l.b16 %v409
        %v1028 = vunpack.c.h.b16 %v409
        %v1029 = vunpack.c.l.b16 %v410
        %v1030 = vunpack.c.h.b16 %v410
        %v1031 = vunpack.c.l.b16 %v411
        %v1032 = vunpack.c.h.b16 %v411
        %v1033 = vunpack.c.l.b16 %v412
        %v1034 = vunpack.c.h.b16 %v412
        %v1035 = vunpack.c.l.b16 %v413
        %v1036 = vunpack.c.h.b16 %v413
        %v1037 = vunpack.c.l.b16 %v414
        %v1038 = vunpack.c.h.b16 %v414
        %v1039 = vunpack.c.l.b16 %v415
        %v1040 = vunpack.c.h.b16 %v415
        %v1041 = vunpack.c.l.b16 %v416
        %v1042 = vunpack.c.h.b16 %v416
        %v1043 = vunpack.c.l.b16 %v417
        %v1044 = vunpack.c.h.b16 %v417
        %v1045 = vunpack.c.l.b16 %v418
        %v1046 = vunpack.c.h.b16 %v418
        %v1047 = vunpack.c.l.b16 %v419
        %v1048 = vunpack.c.h.b16 %v419
        %v1049 = vunpack.c.l.b16 %v420
        %v1050 = vunpack.c.h.b16 %v420
        %v1051 = vunpack.c.l.b16 %v421
        %v1052 = vunpack.c.h.b16 %v421
        %v1053 = vunpack.c.l.b16 %v422
        %v1054 = vunpack.c.h.b16 %v422
        %v1055 = vunpack.c.l.b16 %v423
        %v1056 = vunpack.c.h.b16 %v423
        %v1057 = vunpack.c.l.b16 %v424
        %v1058 = vunpack.c.h.b16 %v424
        %v1059 = vunpack.c.l.b16 %v425
        %v1060 = vunpack.c.h.b16 %v425
        %v1061 = vunpack.c.l.b16 %v426
        %v1062 = vunpack.c.h.b16 %v426
        %v1063 = vunpack.c.l.b16 %v427
        %v1064 = vunpack.c.h.b16 %v427
        %v1065 = vunpack.c.l.b16 %v428
        %v1066 = vunpack.c.h.b16 %v428
        %v1067 = vunpack.c.l.b16 %v429
        %v1068 = vunpack.c.h.b16 %v429
        %v1069 = vunpack.c.l.b16 %v430
        %v1070 = vunpack.c.h.b16 %v430
        %v1071 = vunpack.c.l.b16 %v431
        %v1072 = vunpack.c.h.b16 %v431
        %v1073 = vunpack.c.l.b16 %v432
        %v1074 = vunpack.c.h.b16 %v432
        %v1075 = vunpack.c.l.b16 %v433
        %v1076 = vunpack.c.h.b16 %v433
        %v1077 = vunpack.c.l.b16 %v434
        %v1078 = vunpack.c.h.b16 %v434
        %v1079 = vunpack.c.l.b16 %v435
        %v1080 = vunpack.c.h.b16 %v435
        %v1081 = vunpack.c.l.b16 %v436
        %v1082 = vunpack.c.h.b16 %v436
        %v1083 = vunpack.c.l.b16 %v437
        %v1084 = vunpack.c.h.b16 %v437
        %v1085 = vunpack.c.l.b16 %v438
        %v1086 = vunpack.c.h.b16 %v438
        %v1087 = vunpack.c.l.b16 %v439
        %v1088 = vunpack.c.h.b16 %v439
        %v1089 = vunpack.c.l.b16 %v440
        %v1090 = vunpack.c.h.b16 %v440
        %v1091 = vunpack.c.l.b16 %v441
        %v1092 = vunpack.c.h.b16 %v441
        %v1093 = vunpack.c.l.b16 %v442
        %v1094 = vunpack.c.h.b16 %v442
        %v1095 = vunpack.c.l.b16 %v443
        %v1096 = vunpack.c.h.b16 %v443
        %v1097 = vunpack.c.l.b16 %v444
        %v1098 = vunpack.c.h.b16 %v444
        %v1099 = vunpack.c.l.b16 %v445
        %v1100 = vunpack.c.h.b16 %v445
        %v1101 = vunpack.c.l.b16 %v446
        %v1102 = vunpack.c.h.b16 %v446
        %v1103 = vunpack.c.l.b16 %v447
        %v1104 = vunpack.c.h.b16 %v447
        %v1105 = vunpack.c.l.b16 %v448
        %v1106 = vunpack.c.h.b16 %v448
        %v1107 = vunpack.c.l.b16 %v449
        %v1108 = vunpack.c.h.b16 %v449
        %v1109 = vunpack.c.l.b16 %v450
        %v1110 = vunpack.c.h.b16 %v450
        %v1111 = vunpack.c.l.b16 %v451
        %v1112 = vunpack.c.h.b16 %v451
        %v1113 = vunpack.c.l.b16 %v452
        %v1114 = vunpack.c.h.b16 %v452
        %v1115 = vunpack.c.l.b16 %v453
        %v1116 = vunpack.c.h.b16 %v453
        %v1117 = vunpack.c.l.b16 %v454
        %v1118 = vunpack.c.h.b16 %v454
        %v1119 = vunpack.c.l.b16 %v455
        %v1120 = vunpack.c.h.b16 %v455
        %v1121 = vunpack.c.l.b16 %v456
        %v1122 = vunpack.c.h.b16 %v456
        %v1123 = vunpack.c.l.b16 %v457
        %v1124 = vunpack.c.h.b16 %v457
        %v1125 = vunpack.c.l.b16 %v458
        %v1126 = vunpack.c.h.b16 %v458
        %v1127 = vunpack.c.l.b16 %v459
        %v1128 = vunpack.c.h.b16 %v459
        %v1129 = vunpack.c.l.b16 %v460
        %v1130 = vunpack.c.h.b16 %v460
        %v1131 = vunpack.c.l.b16 %v461
        %v1132 = vunpack.c.h.b16 %v461
        %v1133 = vunpack.c.l.b16 %v462
        %v1134 = vunpack.c.h.b16 %v462
        %v1135 = vunpack.c.l.b16 %v463
        %v1136 = vunpack.c.h.b16 %v463
        %v1137 = vunpack.c.l.b16 %v464
        %v1138 = vunpack.c.h.b16 %v464
        %v1139 = vunpack.c.l.b16 %v465
        %v1140 = vunpack.c.h.b16 %v465
        %v1141 = vunpack.c.l.b16 %v466
        %v1142 = vunpack.c.h.b16 %v466
        %v1143 = vunpack.c.l.b16 %v467
        %v1144 = vunpack.c.h.b16 %v467
        %v1145 = vunpack.c.l.b16 %v468
        %v1146 = vunpack.c.h.b16 %v468
        %v1147 = vunpack.c.l.b16 %v469
        %v1148 = vunpack.c.h.b16 %v469
        %v1149 = vunpack.c.l.b16 %v470
        %v1150 = vunpack.c.h.b16 %v470
        %v1151 = vunpack.c.l.b16 %v471
        %v1152 = vunpack.c.h.b16 %v471
        %v1153 = vunpack.c.l.b16 %v472
        %v1154 = vunpack.c.h.b16 %v472
        %v1155 = vunpack.c.l.b16 %v473
        %v1156 = vunpack.c.h.b16 %v473
        %v1157 = vunpack.c.l.b16 %v474
        %v1158 = vunpack.c.h.b16 %v474
        %v1159 = vunpack.c.l.b16 %v475
        %v1160 = vunpack.c.h.b16 %v475
        %v1161 = vunpack.c.l.b16 %v476
        %v1162 = vunpack.c.h.b16 %v476
        %v1163 = vunpack.c.l.b16 %v477
        %v1164 = vunpack.c.h.b16 %v477
        %v1165 = vunpack.c.l.b16 %v478
        %v1166 = vunpack.c.h.b16 %v478
        %v1167 = vunpack.c.l.b16 %v479
        %v1168 = vunpack.c.h.b16 %v479
        %v1169 = vunpack.c.l.b16 %v480
        %v1170 = vunpack.c.h.b16 %v480
        %v1171 = vunpack.c.l.b16 %v481
        %v1172 = vunpack.c.h.b16 %v481
        %v1173 = vunpack.c.l.b16 %v482
        %v1174 = vunpack.c.h.b16 %v482
        %v1175 = vunpack.c.l.b16 %v483
        %v1176 = vunpack.c.h.b16 %v483
        %v1177 = vunpack.c.l.b16 %v484
        %v1178 = vunpack.c.h.b16 %v484
        %v1179 = vunpack.c.l.b16 %v485
        %v1180 = vunpack.c.h.b16 %v485
        %v1181 = vunpack.c.l.b16 %v486
        %v1182 = vunpack.c.h.b16 %v486
        %v1183 = vunpack.c.l.b16 %v487
        %v1184 = vunpack.c.h.b16 %v487
        %v1185 = vunpack.c.l.b16 %v488
        %v1186 = vunpack.c.h.b16 %v488
        %v1187 = vunpack.c.l.b16 %v489
        %v1188 = vunpack.c.h.b16 %v489
        %v1189 = vunpack.c.l.b16 %v490
        %v1190 = vunpack.c.h.b16 %v490
        %v1191 = vunpack.c.l.b16 %v491
        %v1192 = vunpack.c.h.b16 %v491
        %v1193 = vunpack.c.l.b16 %v492
        %v1194 = vunpack.c.h.b16 %v492
        %v1195 = vunpack.c.l.b16 %v493
        %v1196 = vunpack.c.h.b16 %v493
        %v1197 = vunpack.c.l.b16 %v494
        %v1198 = vunpack.c.h.b16 %v494
        %v1199 = vunpack.c.l.b16 %v495
        %v1200 = vunpack.c.h.b16 %v495
        %v1201 = vunpack.c.l.b16 %v496
        %v1202 = vunpack.c.h.b16 %v496
        %v1203 = vunpack.c.l.b16 %v497
        %v1204 = vunpack.c.h.b16 %v497
        %v1205 = vunpack.c.l.b16 %v498
        %v1206 = vunpack.c.h.b16 %v498
        %v1207 = vunpack.c.l.b16 %v499
        %v1208 = vunpack.c.h.b16 %v499
        %v1209 = vunpack.c.l.b16 %v500
        %v1210 = vunpack.c.h.b16 %v500
        %v1211 = vunpack.c.l.b16 %v501
        %v1212 = vunpack.c.h.b16 %v501
        %v1213 = vunpack.c.l.b16 %v502
        %v1214 = vunpack.c.h.b16 %v502
        %v1215 = vunpack.c.l.b16 %v503
        %v1216 = vunpack.c.h.b16 %v503
        %v1217 = vunpack.c.l.b16 %v504
        %v1218 = vunpack.c.h.b16 %v504
        %v1219 = vunpack.c.l.b16 %v505
        %v1220 = vunpack.c.h.b16 %v505
        %v1221 = vunpack.c.l.b16 %v506
        %v1222 = vunpack.c.h.b16 %v506
        %v1223 = vunpack.c.l.b16 %v507
        %v1224 = vunpack.c.h.b16 %v507
        %v1225 = vunpack.c.l.b16 %v508
        %v1226 = vunpack.c.h.b16 %v508
        %v1227 = vunpack.c.l.b16 %v509
        %v1228 = vunpack.c.h.b16 %v509
        %v1229 = vunpack.c.l.b16 %v510
        %v1230 = vunpack.c.h.b16 %v510
        %v1231 = vunpack.c.l.b16 %v511
        %v1232 = vunpack.c.h.b16 %v511
        %v1233 = vunpack.c.l.b16 %v512
        %v1234 = vunpack.c.h.b16 %v512
        %v1235 = vunpack.c.l.b16 %v513
        %v1236 = vunpack.c.h.b16 %v513
        %v1237 = vunpack.c.l.b16 %v514
        %v1238 = vunpack.c.h.b16 %v514
        %v1239 = vunpack.c.l.b16 %v515
        %v1240 = vunpack.c.h.b16 %v515
        %v1241 = vunpack.c.l.b16 %v516
        %v1242 = vunpack.c.h.b16 %v516
        %v1243 = vunpack.c.l.b16 %v517
        %v1244 = vunpack.c.h.b16 %v517
        %v1245 = vunpack.c.l.b16 %v518
        %v1246 = vunpack.c.h.b16 %v518
        %v1247 = vunpack.c.l.b16 %v519
        %v1248 = vunpack.c.h.b16 %v519
        %v1249 = vunpack.c.l.b16 %v520
        %v1250 = vunpack.c.h.b16 %v520
        %v1251 = vunpack.c.l.b16 %v521
        %v1252 = vunpack.c.h.b16 %v521
        %v1253 = vunpack.c.l.b16 %v522
        %v1254 = vunpack.c.h.b16 %v522
        %v1255 = vunpack.c.l.b16 %v523
        %v1256 = vunpack.c.h.b16 %v523
        %v1257 = vunpack.c.l.b16 %v524
        %v1258 = vunpack.c.h.b16 %v524
        %v1259 = vunpack.c.l.b16 %v525
        %v1260 = vunpack.c.h.b16 %v525
        %v1261 = vunpack.c.l.b16 %v526
        %v1262 = vunpack.c.h.b16 %v526
        %v1263 = vunpack.c.l.b16 %v527
        %v1264 = vunpack.c.h.b16 %v527
        %v1265 = vunpack.c.l.b16 %v528
        %v1266 = vunpack.c.h.b16 %v528
        %v1267 = vunpack.c.l.b16 %v529
        %v1268 = vunpack.c.h.b16 %v529
        %v1269 = vunpack.c.l.b16 %v530
        %v1270 = vunpack.c.h.b16 %v530
        %v1271 = vunpack.c.l.b16 %v531
        %v1272 = vunpack.c.h.b16 %v531
        %v1273 = vunpack.c.l.b16 %v532
        %v1274 = vunpack.c.h.b16 %v532
        %v1275 = vunpack.c.l.b16 %v533
        %v1276 = vunpack.c.h.b16 %v533
        %v1277 = vunpack.c.l.b16 %v534
        %v1278 = vunpack.c.h.b16 %v534
        %v1279 = vunpack.c.l.b16 %v535
        %v1280 = vunpack.c.h.b16 %v535
        %v1281 = vunpack.c.l.b16 %v536
        %v1282 = vunpack.c.h.b16 %v536
        %v1283 = vunpack.c.l.b16 %v537
        %v1284 = vunpack.c.h.b16 %v537
        %v1285 = vunpack.c.l.b16 %v538
        %v1286 = vunpack.c.h.b16 %v538
        %v1287 = vunpack.c.l.b16 %v539
        %v1288 = vunpack.c.h.b16 %v539
        %v1289 = vunpack.c.l.b16 %v540
        %v1290 = vunpack.c.h.b16 %v540
        %v1291 = vunpack.c.l.b16 %v541
        %v1292 = vunpack.c.h.b16 %v541
        %v1293 = vunpack.c.l.b16 %v542
        %v1294 = vunpack.c.h.b16 %v542
        %v1295 = vunpack.c.l.b16 %v543
        %v1296 = vunpack.c.h.b16 %v543
        %v1297 = vunpack.c.l.b16 %v544
        %v1298 = vunpack.c.h.b16 %v544
        %v1299 = vunpack.c.l.b16 %v545
        %v1300 = vunpack.c.h.b16 %v545
        %v1301 = vunpack.c.l.b16 %v546
        %v1302 = vunpack.c.h.b16 %v546
        %v1303 = vunpack.c.l.b16 %v547
        %v1304 = vunpack.c.h.b16 %v547
        %v1305 = vunpack.c.l.b16 %v548
        %v1306 = vunpack.c.h.b16 %v548
        %v1307 = vunpack.c.l.b16 %v549
        %v1308 = vunpack.c.h.b16 %v549
        %v1309 = vunpack.c.l.b16 %v550
        %v1310 = vunpack.c.h.b16 %v550
        %v1311 = vunpack.c.l.b16 %v551
        %v1312 = vunpack.c.h.b16 %v551
        %v1313 = vunpack.c.l.b16 %v552
        %v1314 = vunpack.c.h.b16 %v552
        %v1315 = vunpack.c.l.b16 %v553
        %v1316 = vunpack.c.h.b16 %v553
        %v1317 = vunpack.c.l.b16 %v554
        %v1318 = vunpack.c.h.b16 %v554
        %v1319 = vunpack.c.l.b16 %v555
        %v1320 = vunpack.c.h.b16 %v555
        %v1321 = vunpack.c.l.b16 %v556
        %v1322 = vunpack.c.h.b16 %v556
        %v1323 = vunpack.c.l.b16 %v557
        %v1324 = vunpack.c.h.b16 %v557
        %v1325 = vunpack.c.l.b16 %v558
        %v1326 = vunpack.c.h.b16 %v558
        %v1327 = vunpack.c.l.b16 %v559
        %v1328 = vunpack.c.h.b16 %v559
        %v1329 = vunpack.c.l.b16 %v560
        %v1330 = vunpack.c.h.b16 %v560
        %v1331 = vunpack.c.l.b16 %v561
        %v1332 = vunpack.c.h.b16 %v561
        %v1333 = vunpack.c.l.b16 %v562
        %v1334 = vunpack.c.h.b16 %v562
        %v1335 = vunpack.c.l.b16 %v563
        %v1336 = vunpack.c.h.b16 %v563
        %v1337 = vunpack.c.l.b16 %v564
        %v1338 = vunpack.c.h.b16 %v564
        %v1339 = vunpack.c.l.b16 %v565
        %v1340 = vunpack.c.h.b16 %v565
        %v1341 = vunpack.c.l.b16 %v566
        %v1342 = vunpack.c.h.b16 %v566
        %v1343 = vunpack.c.l.b16 %v567
        %v1344 = vunpack.c.h.b16 %v567
        %v1345 = vunpack.c.l.b16 %v568
        %v1346 = vunpack.c.h.b16 %v568
        %v1347 = vunpack.c.l.b16 %v569
        %v1348 = vunpack.c.h.b16 %v569
        %v1349 = vunpack.c.l.b16 %v570
        %v1350 = vunpack.c.h.b16 %v570
        %v1351 = vpack.c.b16 %v841, %v839
        %v1352 = vpack.c.b16 %v842, %v840
        %v1353 = vpack.c.b16 %v845, %v843
        %v1354 = vpack.c.b16 %v846, %v844
        %v1355 = vpack.c.b16 %v849, %v847
        %v1356 = vpack.c.b16 %v850, %v848
        %v1357 = vpack.c.b16 %v853, %v851
        %v1358 = vpack.c.b16 %v854, %v852
        %v1359 = vpack.c.b16 %v857, %v855
        %v1360 = vpack.c.b16 %v858, %v856
        %v1361 = vpack.c.b16 %v861, %v859
        %v1362 = vpack.c.b16 %v862, %v860
        %v1363 = vpack.c.b16 %v865, %v863
        %v1364 = vpack.c.b16 %v866, %v864
        %v1365 = vpack.c.b16 %v869, %v867
        %v1366 = vpack.c.b16 %v870, %v868
        %v1367 = vpack.c.b16 %v873, %v871
        %v1368 = vpack.c.b16 %v874, %v872
        %v1369 = vpack.c.b16 %v877, %v875
        %v1370 = vpack.c.b16 %v878, %v876
        %v1371 = vpack.c.b16 %v881, %v879
        %v1372 = vpack.c.b16 %v882, %v880
        %v1373 = vpack.c.b16 %v885, %v883
        %v1374 = vpack.c.b16 %v886, %v884
        %v1375 = vpack.c.b16 %v889, %v887
        %v1376 = vpack.c.b16 %v890, %v888
        %v1377 = vpack.c.b16 %v893, %v891
        %v1378 = vpack.c.b16 %v894, %v892
        %v1379 = vpack.c.b16 %v897, %v895
        %v1380 = vpack.c.b16 %v898, %v896
        %v1381 = vpack.c.b16 %v901, %v899
        %v1382 = vpack.c.b16 %v902, %v900
        %v1383 = vpack.c.b16 %v905, %v903
        %v1384 = vpack.c.b16 %v906, %v904
        %v1385 = vpack.c.b16 %v909, %v907
        %v1386 = vpack.c.b16 %v910, %v908
        %v1387 = vpack.c.b16 %v913, %v911
        %v1388 = vpack.c.b16 %v914, %v912
        %v1389 = vpack.c.b16 %v917, %v915
        %v1390 = vpack.c.b16 %v918, %v916
        %v1391 = vpack.c.b16 %v921, %v919
        %v1392 = vpack.c.b16 %v922, %v920
        %v1393 = vpack.c.b16 %v925, %v923
        %v1394 = vpack.c.b16 %v926, %v924
        %v1395 = vpack.c.b16 %v929, %v927
        %v1396 = vpack.c.b16 %v930, %v928
        %v1397 = vpack.c.b16 %v933, %v931
        %v1398 = vpack.c.b16 %v934, %v932
        %v1399 = vpack.c.b16 %v937, %v935
        %v1400 = vpack.c.b16 %v938, %v936
        %v1401 = vpack.c.b16 %v941, %v939
        %v1402 = vpack.c.b16 %v942, %v940
        %v1403 = vpack.c.b16 %v945, %v943
        %v1404 = vpack.c.b16 %v946, %v944
        %v1405 = vpack.c.b16 %v949, %v947
        %v1406 = vpack.c.b16 %v950, %v948
        %v1407 = vpack.c.b16 %v953, %v951
        %v1408 = vpack.c.b16 %v954, %v952
        %v1409 = vpack.c.b16 %v957, %v955
        %v1410 = vpack.c.b16 %v958, %v956
        %v1411 = vpack.c.b16 %v961, %v959
        %v1412 = vpack.c.b16 %v962, %v960
        %v1413 = vpack.c.b16 %v965, %v963
        %v1414 = vpack.c.b16 %v966, %v964
        %v1415 = vpack.c.b16 %v969, %v967
        %v1416 = vpack.c.b16 %v970, %v968
        %v1417 = vpack.c.b16 %v973, %v971
        %v1418 = vpack.c.b16 %v974, %v972
        %v1419 = vpack.c.b16 %v977, %v975
        %v1420 = vpack.c.b16 %v978, %v976
        %v1421 = vpack.c.b16 %v981, %v979
        %v1422 = vpack.c.b16 %v982, %v980
        %v1423 = vpack.c.b16 %v985, %v983
        %v1424 = vpack.c.b16 %v986, %v984
        %v1425 = vpack.c.b16 %v989, %v987
        %v1426 = vpack.c.b16 %v990, %v988
        %v1427 = vpack.c.b16 %v993, %v991
        %v1428 = vpack.c.b16 %v994, %v992
        %v1429 = vpack.c.b16 %v997, %v995
        %v1430 = vpack.c.b16 %v998, %v996
        %v1431 = vpack.c.b16 %v1001, %v999
        %v1432 = vpack.c.b16 %v1002, %v1000
        %v1433 = vpack.c.b16 %v1005, %v1003
        %v1434 = vpack.c.b16 %v1006, %v1004
        %v1435 = vpack.c.b16 %v1009, %v1007
        %v1436 = vpack.c.b16 %v1010, %v1008
        %v1437 = vpack.c.b16 %v1013, %v1011
        %v1438 = vpack.c.b16 %v1014, %v1012
        %v1439 = vpack.c.b16 %v1017, %v1015
        %v1440 = vpack.c.b16 %v1018, %v1016
        %v1441 = vpack.c.b16 %v1021, %v1019
        %v1442 = vpack.c.b16 %v1022, %v1020
        %v1443 = vpack.c.b16 %v1025, %v1023
        %v1444 = vpack.c.b16 %v1026, %v1024
        %v1445 = vpack.c.b16 %v1029, %v1027
        %v1446 = vpack.c.b16 %v1030, %v1028
        %v1447 = vpack.c.b16 %v1033, %v1031
        %v1448 = vpack.c.b16 %v1034, %v1032
        %v1449 = vpack.c.b16 %v1037, %v1035
        %v1450 = vpack.c.b16 %v1038, %v1036
        %v1451 = vpack.c.b16 %v1041, %v1039
        %v1452 = vpack.c.b16 %v1042, %v1040
        %v1453 = vpack.c.b16 %v1045, %v1043
        %v1454 = vpack.c.b16 %v1046, %v1044
        %v1455 = vpack.c.b16 %v1049, %v1047
        %v1456 = vpack.c.b16 %v1050, %v1048
        %v1457 = vpack.c.b16 %v1053, %v1051
        %v1458 = vpack.c.b16 %v1054, %v1052
        %v1459 = vpack.c.b16 %v1057, %v1055
        %v1460 = vpack.c.b16 %v1058, %v1056
        %v1461 = vpack.c.b16 %v1061, %v1059
        %v1462 = vpack.c.b16 %v1062, %v1060
        %v1463 = vpack.c.b16 %v1065, %v1063
        %v1464 = vpack.c.b16 %v1066, %v1064
        %v1465 = vpack.c.b16 %v1069, %v1067
        %v1466 = vpack.c.b16 %v1070, %v1068
        %v1467 = vpack.c.b16 %v1073, %v1071
        %v1468 = vpack.c.b16 %v1074, %v1072
        %v1469 = vpack.c.b16 %v1077, %v1075
        %v1470 = vpack.c.b16 %v1078, %v1076
        %v1471 = vpack.c.b16 %v1081, %v1079
        %v1472 = vpack.c.b16 %v1082, %v1080
        %v1473 = vpack.c.b16 %v1085, %v1083
        %v1474 = vpack.c.b16 %v1086, %v1084
        %v1475 = vpack.c.b16 %v1089, %v1087
        %v1476 = vpack.c.b16 %v1090, %v1088
        %v1477 = vpack.c.b16 %v1093, %v1091
        %v1478 = vpack.c.b16 %v1094, %v1092
        %v1479 = vpack.c.b16 %v1097, %v1095
        %v1480 = vpack.c.b16 %v1098, %v1096
        %v1481 = vpack.c.b16 %v1101, %v1099
        %v1482 = vpack.c.b16 %v1102, %v1100
        %v1483 = vpack.c.b16 %v1105, %v1103
        %v1484 = vpack.c.b16 %v1106, %v1104
        %v1485 = vpack.c.b16 %v1109, %v1107
        %v1486 = vpack.c.b16 %v1110, %v1108
        %v1487 = vpack.c.b16 %v1113, %v1111
        %v1488 = vpack.c.b16 %v1114, %v1112
        %v1489 = vpack.c.b16 %v1117, %v1115
        %v1490 = vpack.c.b16 %v1118, %v1116
        %v1491 = vpack.c.b16 %v1121, %v1119
        %v1492 = vpack.c.b16 %v1122, %v1120
        %v1493 = vpack.c.b16 %v1125, %v1123
        %v1494 = vpack.c.b16 %v1126, %v1124
        %v1495 = vpack.c.b16 %v1129, %v1127
        %v1496 = vpack.c.b16 %v1130, %v1128
        %v1497 = vpack.c.b16 %v1133, %v1131
        %v1498 = vpack.c.b16 %v1134, %v1132
        %v1499 = vpack.c.b16 %v1137, %v1135
        %v1500 = vpack.c.b16 %v1138, %v1136
        %v1501 = vpack.c.b16 %v1141, %v1139
        %v1502 = vpack.c.b16 %v1142, %v1140
        %v1503 = vpack.c.b16 %v1145, %v1143
        %v1504 = vpack.c.b16 %v1146, %v1144
        %v1505 = vpack.c.b16 %v1149, %v1147
        %v1506 = vpack.c.b16 %v1150, %v1148
        %v1507 = vpack.c.b16 %v1153, %v1151
        %v1508 = vpack.c.b16 %v1154, %v1152
        %v1509 = vpack.c.b16 %v1157, %v1155
        %v1510 = vpack.c.b16 %v1158, %v1156
        %v1511 = vpack.c.b16 %v1161, %v1159
        %v1512 = vpack.c.b16 %v1162, %v1160
        %v1513 = vpack.c.b16 %v1165, %v1163
        %v1514 = vpack.c.b16 %v1166, %v1164
        %v1515 = vpack.c.b16 %v1169, %v1167
        %v1516 = vpack.c.b16 %v1170, %v1168
        %v1517 = vpack.c.b16 %v1173, %v1171
        %v1518 = vpack.c.b16 %v1174, %v1172
        %v1519 = vpack.c.b16 %v1177, %v1175
        %v1520 = vpack.c.b16 %v1178, %v1176
        %v1521 = vpack.c.b16 %v1181, %v1179
        %v1522 = vpack.c.b16 %v1182, %v1180
        %v1523 = vpack.c.b16 %v1185, %v1183
        %v1524 = vpack.c.b16 %v1186, %v1184
        %v1525 = vpack.c.b16 %v1189, %v1187
        %v1526 = vpack.c.b16 %v1190, %v1188
        %v1527 = vpack.c.b16 %v1193, %v1191
        %v1528 = vpack.c.b16 %v1194, %v1192
        %v1529 = vpack.c.b16 %v1197, %v1195
        %v1530 = vpack.c.b16 %v1198, %v1196
        %v1531 = vpack.c.b16 %v1201, %v1199
        %v1532 = vpack.c.b16 %v1202, %v1200
        %v1533 = vpack.c.b16 %v1205, %v1203
        %v1534 = vpack.c.b16 %v1206, %v1204
        %v1535 = vpack.c.b16 %v1209, %v1207
        %v1536 = vpack.c.b16 %v1210, %v1208
        %v1537 = vpack.c.b16 %v1213, %v1211
        %v1538 = vpack.c.b16 %v1214, %v1212
        %v1539 = vpack.c.b16 %v1217, %v1215
        %v1540 = vpack.c.b16 %v1218, %v1216
        %v1541 = vpack.c.b16 %v1221, %v1219
        %v1542 = vpack.c.b16 %v1222, %v1220
        %v1543 = vpack.c.b16 %v1225, %v1223
        %v1544 = vpack.c.b16 %v1226, %v1224
        %v1545 = vpack.c.b16 %v1229, %v1227
        %v1546 = vpack.c.b16 %v1230, %v1228
        %v1547 = vpack.c.b16 %v1233, %v1231
        %v1548 = vpack.c.b16 %v1234, %v1232
        %v1549 = vpack.c.b16 %v1237, %v1235
        %v1550 = vpack.c.b16 %v1238, %v1236
        %v1551 = vpack.c.b16 %v1241, %v1239
        %v1552 = vpack.c.b16 %v1242, %v1240
        %v1553 = vpack.c.b16 %v1245, %v1243
        %v1554 = vpack.c.b16 %v1246, %v1244
        %v1555 = vpack.c.b16 %v1249, %v1247
        %v1556 = vpack.c.b16 %v1250, %v1248
        %v1557 = vpack.c.b16 %v1253, %v1251
        %v1558 = vpack.c.b16 %v1254, %v1252
        %v1559 = vpack.c.b16 %v1257, %v1255
        %v1560 = vpack.c.b16 %v1258, %v1256
        %v1561 = vpack.c.b16 %v1261, %v1259
        %v1562 = vpack.c.b16 %v1262, %v1260
        %v1563 = vpack.c.b16 %v1265, %v1263
        %v1564 = vpack.c.b16 %v1266, %v1264
        %v1565 = vpack.c.b16 %v1269, %v1267
        %v1566 = vpack.c.b16 %v1270, %v1268
        %v1567 = vpack.c.b16 %v1273, %v1271
        %v1568 = vpack.c.b16 %v1274, %v1272
        %v1569 = vpack.c.b16 %v1277, %v1275
        %v1570 = vpack.c.b16 %v1278, %v1276
        %v1571 = vpack.c.b16 %v1281, %v1279
        %v1572 = vpack.c.b16 %v1282, %v1280
        %v1573 = vpack.c.b16 %v1285, %v1283
        %v1574 = vpack.c.b16 %v1286, %v1284
        %v1575 = vpack.c.b16 %v1289, %v1287
        %v1576 = vpack.c.b16 %v1290, %v1288
        %v1577 = vpack.c.b16 %v1293, %v1291
        %v1578 = vpack.c.b16 %v1294, %v1292
        %v1579 = vpack.c.b16 %v1297, %v1295
        %v1580 = vpack.c.b16 %v1298, %v1296
        %v1581 = vpack.c.b16 %v1301, %v1299
        %v1582 = vpack.c.b16 %v1302, %v1300
        %v1583 = vpack.c.b16 %v1305, %v1303
        %v1584 = vpack.c.b16 %v1306, %v1304
        %v1585 = vpack.c.b16 %v1309, %v1307
        %v1586 = vpack.c.b16 %v1310, %v1308
        %v1587 = vpack.c.b16 %v1313, %v1311
        %v1588 = vpack.c.b16 %v1314, %v1312
        %v1589 = vpack.c.b16 %v1317, %v1315
        %v1590 = vpack.c.b16 %v1318, %v1316
        %v1591 = vpack.c.b16 %v1321, %v1319
        %v1592 = vpack.c.b16 %v1322, %v1320
        %v1593 = vpack.c.b16 %v1325, %v1323
        %v1594 = vpack.c.b16 %v1326, %v1324
        %v1595 = vpack.c.b16 %v1329, %v1327
        %v1596 = vpack.c.b16 %v1330, %v1328
        %v1597 = vpack.c.b16 %v1333, %v1331
        %v1598 = vpack.c.b16 %v1334, %v1332
        %v1599 = vpack.c.b16 %v1337, %v1335
        %v1600 = vpack.c.b16 %v1338, %v1336
        %v1601 = vpack.c.b16 %v1341, %v1339
        %v1602 = vpack.c.b16 %v1342, %v1340
        %v1603 = vpack.c.b16 %v1345, %v1343
        %v1604 = vpack.c.b16 %v1346, %v1344
        %v1605 = vpack.c.b16 %v1349, %v1347
        %v1606 = vpack.c.b16 %v1350, %v1348
        %1863 = vmatprep.subr.bf16.mxu0 %v1366
        %1864 = vmatpush1.bf16.msra.mxu0 %v1365
        %1865 = vmatprep.subr.bf16.mxu0 %v1364
        %1866 = vmatpush1.bf16.msra.mxu0 %v1363
        %1867 = vmatprep.subr.bf16.mxu0 %v1362
        %1868 = vmatpush1.bf16.msra.mxu0 %v1361
        %1869 = vmatprep.subr.bf16.mxu0 %v1360
        %1870 = vmatpush1.bf16.msra.mxu0 %v1359
        %1871 = vmatprep.subr.bf16.mxu0 %v1358
        %1872 = vmatpush1.bf16.msra.mxu0 %v1357
        %1873 = vmatprep.subr.bf16.mxu0 %v1356
        %1874 = vmatpush1.bf16.msra.mxu0 %v1355
        %1875 = vmatprep.subr.bf16.mxu0 %v1354
        %1876 = vmatpush1.bf16.msra.mxu0 %v1353
        %1877 = vmatprep.subr.bf16.mxu0 %v1352
        %1878 = vmatpush1.bf16.msra.mxu0 %v1351
        %1879 = vmatprep.subr.bf16.mxu0 %v1382
        %1880 = vmatpush2.bf16.msra.mxu0 %v1381
        %1881 = vmatprep.subr.bf16.mxu0 %v1380
        %1882 = vmatpush2.bf16.msra.mxu0 %v1379
        %1883 = vmatprep.subr.bf16.mxu0 %v1378
        %1884 = vmatpush2.bf16.msra.mxu0 %v1377
        %1885 = vmatprep.subr.bf16.mxu0 %v1376
        %1886 = vmatpush2.bf16.msra.mxu0 %v1375
        %1887 = vmatprep.subr.bf16.mxu0 %v1374
        %1888 = vmatpush2.bf16.msra.mxu0 %v1373
        %1889 = vmatprep.subr.bf16.mxu0 %v1372
        %1890 = vmatpush2.bf16.msra.mxu0 %v1371
        %1891 = vmatprep.subr.bf16.mxu0 %v1370
        %1892 = vmatpush2.bf16.msra.mxu0 %v1369
        %1893 = vmatprep.subr.bf16.mxu0 %v1368
        %1894 = vmatpush2.bf16.msra.mxu0 %v1367
        %1895 = vmatprep.mubr.bf16.mxu0 %v300
        %1896 = vmatmul.mubr.bf16.gmra.mxu0 %v299
        %v1897 = vpop.f32.mrf.mxu0
        %v1898 = vadd.f32 %v576, %v1897
        %v1899 = vpop.f32.mrf.mxu0
        %v1900 = vadd.f32 %v580, %v1899
        %v1901 = vpop.f32.mrf.mxu0
        %v1902 = vadd.f32 %v576, %v1901
        %v1903 = vpop.f32.mrf.mxu0
        %v1904 = vadd.f32 %v580, %v1903
        %1905 = vdwg.mxu0
        %1906 = vmatprep.subr.bf16.mxu0 %v1398
        %1907 = vmatpush1.bf16.msra.mxu0 %v1397
        %1908 = vmatprep.subr.bf16.mxu0 %v1396
        %1909 = vmatpush1.bf16.msra.mxu0 %v1395
        %1910 = vmatprep.subr.bf16.mxu0 %v1394
        %1911 = vmatpush1.bf16.msra.mxu0 %v1393
        %1912 = vmatprep.subr.bf16.mxu0 %v1392
        %1913 = vmatpush1.bf16.msra.mxu0 %v1391
        %1914 = vmatprep.subr.bf16.mxu0 %v1390
        %1915 = vmatpush1.bf16.msra.mxu0 %v1389
        %1916 = vmatprep.subr.bf16.mxu0 %v1388
        %1917 = vmatpush1.bf16.msra.mxu0 %v1387
        %1918 = vmatprep.subr.bf16.mxu0 %v1386
        %1919 = vmatpush1.bf16.msra.mxu0 %v1385
        %1920 = vmatprep.subr.bf16.mxu0 %v1384
        %1921 = vmatpush1.bf16.msra.mxu0 %v1383
        %1922 = vmatprep.subr.bf16.mxu0 %v1414
        %1923 = vmatpush2.bf16.msra.mxu0 %v1413
        %1924 = vmatprep.subr.bf16.mxu0 %v1412
        %1925 = vmatpush2.bf16.msra.mxu0 %v1411
        %1926 = vmatprep.subr.bf16.mxu0 %v1410
        %1927 = vmatpush2.bf16.msra.mxu0 %v1409
        %1928 = vmatprep.subr.bf16.mxu0 %v1408
        %1929 = vmatpush2.bf16.msra.mxu0 %v1407
        %1930 = vmatprep.subr.bf16.mxu0 %v1406
        %1931 = vmatpush2.bf16.msra.mxu0 %v1405
        %1932 = vmatprep.subr.bf16.mxu0 %v1404
        %1933 = vmatpush2.bf16.msra.mxu0 %v1403
        %1934 = vmatprep.subr.bf16.mxu0 %v1402
        %1935 = vmatpush2.bf16.msra.mxu0 %v1401
        %1936 = vmatprep.subr.bf16.mxu0 %v1400
        %1937 = vmatpush2.bf16.msra.mxu0 %v1399
        %1938 = vmatprep.mubr.bf16.mxu0 %v302
        %1939 = vmatmul.mubr.bf16.gmra.mxu0 %v301
        %v1940 = vpop.f32.mrf.mxu0
        %v1941 = vadd.f32 %v1898, %v1940
        %v1942 = vpop.f32.mrf.mxu0
        %v1943 = vadd.f32 %v1900, %v1942
        %v1944 = vpop.f32.mrf.mxu0
        %v1945 = vadd.f32 %v1902, %v1944
        %v1946 = vpop.f32.mrf.mxu0
        %v1947 = vadd.f32 %v1904, %v1946
        %1948 = vdwg.mxu0
        %1949 = vmatprep.subr.bf16.mxu0 %v1430
        %1950 = vmatpush1.bf16.msra.mxu0 %v1429
        %1951 = vmatprep.subr.bf16.mxu0 %v1428
        %1952 = vmatpush1.bf16.msra.mxu0 %v1427
        %1953 = vmatprep.subr.bf16.mxu0 %v1426
        %1954 = vmatpush1.bf16.msra.mxu0 %v1425
        %1955 = vmatprep.subr.bf16.mxu0 %v1424
        %1956 = vmatpush1.bf16.msra.mxu0 %v1423
        %1957 = vmatprep.subr.bf16.mxu0 %v1422
        %1958 = vmatpush1.bf16.msra.mxu0 %v1421
        %1959 = vmatprep.subr.bf16.mxu0 %v1420
        %1960 = vmatpush1.bf16.msra.mxu0 %v1419
        %1961 = vmatprep.subr.bf16.mxu0 %v1418
        %1962 = vmatpush1.bf16.msra.mxu0 %v1417
        %1963 = vmatprep.subr.bf16.mxu0 %v1416
        %1964 = vmatpush1.bf16.msra.mxu0 %v1415
        %1965 = vmatprep.subr.bf16.mxu0 %v1446
        %1966 = vmatpush2.bf16.msra.mxu0 %v1445
        %1967 = vmatprep.subr.bf16.mxu0 %v1444
        %1968 = vmatpush2.bf16.msra.mxu0 %v1443
        %1969 = vmatprep.subr.bf16.mxu0 %v1442
        %1970 = vmatpush2.bf16.msra.mxu0 %v1441
        %1971 = vmatprep.subr.bf16.mxu0 %v1440
        %1972 = vmatpush2.bf16.msra.mxu0 %v1439
        %1973 = vmatprep.subr.bf16.mxu0 %v1438
        %1974 = vmatpush2.bf16.msra.mxu0 %v1437
        %1975 = vmatprep.subr.bf16.mxu0 %v1436
        %1976 = vmatpush2.bf16.msra.mxu0 %v1435
        %1977 = vmatprep.subr.bf16.mxu0 %v1434
        %1978 = vmatpush2.bf16.msra.mxu0 %v1433
        %1979 = vmatprep.subr.bf16.mxu0 %v1432
        %1980 = vmatpush2.bf16.msra.mxu0 %v1431
        %1981 = vmatprep.mubr.bf16.mxu0 %v304
        %1982 = vmatmul.mubr.bf16.gmra.mxu0 %v303
        %v1983 = vpop.f32.mrf.mxu0
        %v1984 = vadd.f32 %v1941, %v1983
        %v1985 = vpop.f32.mrf.mxu0
        %v1986 = vadd.f32 %v1943, %v1985
        %v1987 = vpop.f32.mrf.mxu0
        %v1988 = vadd.f32 %v1945, %v1987
        %v1989 = vpop.f32.mrf.mxu0
        %v1990 = vadd.f32 %v1947, %v1989
        %1991 = vdwg.mxu0
        %1992 = vmatprep.subr.bf16.mxu0 %v1462
        %1993 = vmatpush1.bf16.msra.mxu0 %v1461
        %1994 = vmatprep.subr.bf16.mxu0 %v1460
        %1995 = vmatpush1.bf16.msra.mxu0 %v1459
        %1996 = vmatprep.subr.bf16.mxu0 %v1458
        %1997 = vmatpush1.bf16.msra.mxu0 %v1457
        %1998 = vmatprep.subr.bf16.mxu0 %v1456
        %1999 = vmatpush1.bf16.msra.mxu0 %v1455
        %2000 = vmatprep.subr.bf16.mxu0 %v1454
        %2001 = vmatpush1.bf16.msra.mxu0 %v1453
        %2002 = vmatprep.subr.bf16.mxu0 %v1452
        %2003 = vmatpush1.bf16.msra.mxu0 %v1451
        %2004 = vmatprep.subr.bf16.mxu0 %v1450
        %2005 = vmatpush1.bf16.msra.mxu0 %v1449
        %2006 = vmatprep.subr.bf16.mxu0 %v1448
        %2007 = vmatpush1.bf16.msra.mxu0 %v1447
        %2008 = vmatprep.subr.bf16.mxu0 %v1478
        %2009 = vmatpush2.bf16.msra.mxu0 %v1477
        %2010 = vmatprep.subr.bf16.mxu0 %v1476
        %2011 = vmatpush2.bf16.msra.mxu0 %v1475
        %2012 = vmatprep.subr.bf16.mxu0 %v1474
        %2013 = vmatpush2.bf16.msra.mxu0 %v1473
        %2014 = vmatprep.subr.bf16.mxu0 %v1472
        %2015 = vmatpush2.bf16.msra.mxu0 %v1471
        %2016 = vmatprep.subr.bf16.mxu0 %v1470
        %2017 = vmatpush2.bf16.msra.mxu0 %v1469
        %2018 = vmatprep.subr.bf16.mxu0 %v1468
        %2019 = vmatpush2.bf16.msra.mxu0 %v1467
        %2020 = vmatprep.subr.bf16.mxu0 %v1466
        %2021 = vmatpush2.bf16.msra.mxu0 %v1465
        %2022 = vmatprep.subr.bf16.mxu0 %v1464
        %2023 = vmatpush2.bf16.msra.mxu0 %v1463
        %2024 = vmatprep.mubr.bf16.mxu0 %v306
        %2025 = vmatmul.mubr.bf16.gmra.mxu0 %v305
        %v2026 = vpop.f32.mrf.mxu0
        %v2027 = vadd.f32 %v1984, %v2026
        %v2028 = vpop.f32.mrf.mxu0
        %v2029 = vadd.f32 %v1986, %v2028
        %v2030 = vpop.f32.mrf.mxu0
        %v2031 = vadd.f32 %v1988, %v2030
        %v2032 = vpop.f32.mrf.mxu0
        %v2033 = vadd.f32 %v1990, %v2032
        %2034 = vdwg.mxu0
        %2035 = vmatprep.subr.bf16.mxu0 %v1494
        %2036 = vmatpush1.bf16.msra.mxu0 %v1493
        %2037 = vmatprep.subr.bf16.mxu0 %v1492
        %2038 = vmatpush1.bf16.msra.mxu0 %v1491
        %2039 = vmatprep.subr.bf16.mxu0 %v1490
        %2040 = vmatpush1.bf16.msra.mxu0 %v1489
        %2041 = vmatprep.subr.bf16.mxu0 %v1488
        %2042 = vmatpush1.bf16.msra.mxu0 %v1487
        %2043 = vmatprep.subr.bf16.mxu0 %v1486
        %2044 = vmatpush1.bf16.msra.mxu0 %v1485
        %2045 = vmatprep.subr.bf16.mxu0 %v1484
        %2046 = vmatpush1.bf16.msra.mxu0 %v1483
        %2047 = vmatprep.subr.bf16.mxu0 %v1482
        %2048 = vmatpush1.bf16.msra.mxu0 %v1481
        %2049 = vmatprep.subr.bf16.mxu0 %v1480
        %2050 = vmatpush1.bf16.msra.mxu0 %v1479
        %2051 = vmatprep.subr.bf16.mxu0 %v1510
        %2052 = vmatpush2.bf16.msra.mxu0 %v1509
        %2053 = vmatprep.subr.bf16.mxu0 %v1508
        %2054 = vmatpush2.bf16.msra.mxu0 %v1507
        %2055 = vmatprep.subr.bf16.mxu0 %v1506
        %2056 = vmatpush2.bf16.msra.mxu0 %v1505
        %2057 = vmatprep.subr.bf16.mxu0 %v1504
        %2058 = vmatpush2.bf16.msra.mxu0 %v1503
        %2059 = vmatprep.subr.bf16.mxu0 %v1502
        %2060 = vmatpush2.bf16.msra.mxu0 %v1501
        %2061 = vmatprep.subr.bf16.mxu0 %v1500
        %2062 = vmatpush2.bf16.msra.mxu0 %v1499
        %2063 = vmatprep.subr.bf16.mxu0 %v1498
        %2064 = vmatpush2.bf16.msra.mxu0 %v1497
        %2065 = vmatprep.subr.bf16.mxu0 %v1496
        %2066 = vmatpush2.bf16.msra.mxu0 %v1495
        %2067 = vmatprep.mubr.bf16.mxu0 %v308
        %2068 = vmatmul.mubr.bf16.gmra.mxu0 %v307
        %v2069 = vpop.f32.mrf.mxu0
        %v2070 = vadd.f32 %v2027, %v2069
        %v2071 = vpop.f32.mrf.mxu0
        %v2072 = vadd.f32 %v2029, %v2071
        %v2073 = vpop.f32.mrf.mxu0
        %v2074 = vadd.f32 %v2031, %v2073
        %v2075 = vpop.f32.mrf.mxu0
        %v2076 = vadd.f32 %v2033, %v2075
        %2077 = vdwg.mxu0
        %2078 = vmatprep.subr.bf16.mxu0 %v1526
        %2079 = vmatpush1.bf16.msra.mxu0 %v1525
        %2080 = vmatprep.subr.bf16.mxu0 %v1524
        %2081 = vmatpush1.bf16.msra.mxu0 %v1523
        %2082 = vmatprep.subr.bf16.mxu0 %v1522
        %2083 = vmatpush1.bf16.msra.mxu0 %v1521
        %2084 = vmatprep.subr.bf16.mxu0 %v1520
        %2085 = vmatpush1.bf16.msra.mxu0 %v1519
        %2086 = vmatprep.subr.bf16.mxu0 %v1518
        %2087 = vmatpush1.bf16.msra.mxu0 %v1517
        %2088 = vmatprep.subr.bf16.mxu0 %v1516
        %2089 = vmatpush1.bf16.msra.mxu0 %v1515
        %2090 = vmatprep.subr.bf16.mxu0 %v1514
        %2091 = vmatpush1.bf16.msra.mxu0 %v1513
        %2092 = vmatprep.subr.bf16.mxu0 %v1512
        %2093 = vmatpush1.bf16.msra.mxu0 %v1511
        %2094 = vmatprep.subr.bf16.mxu0 %v1542
        %2095 = vmatpush2.bf16.msra.mxu0 %v1541
        %2096 = vmatprep.subr.bf16.mxu0 %v1540
        %2097 = vmatpush2.bf16.msra.mxu0 %v1539
        %2098 = vmatprep.subr.bf16.mxu0 %v1538
        %2099 = vmatpush2.bf16.msra.mxu0 %v1537
        %2100 = vmatprep.subr.bf16.mxu0 %v1536
        %2101 = vmatpush2.bf16.msra.mxu0 %v1535
        %2102 = vmatprep.subr.bf16.mxu0 %v1534
        %2103 = vmatpush2.bf16.msra.mxu0 %v1533
        %2104 = vmatprep.subr.bf16.mxu0 %v1532
        %2105 = vmatpush2.bf16.msra.mxu0 %v1531
        %2106 = vmatprep.subr.bf16.mxu0 %v1530
        %2107 = vmatpush2.bf16.msra.mxu0 %v1529
        %2108 = vmatprep.subr.bf16.mxu0 %v1528
        %2109 = vmatpush2.bf16.msra.mxu0 %v1527
        %2110 = vmatprep.mubr.bf16.mxu0 %v310
        %2111 = vmatmul.mubr.bf16.gmra.mxu0 %v309
        %v2112 = vpop.f32.mrf.mxu0
        %v2113 = vadd.f32 %v2070, %v2112
        %v2114 = vpop.f32.mrf.mxu0
        %v2115 = vadd.f32 %v2072, %v2114
        %v2116 = vpop.f32.mrf.mxu0
        %v2117 = vadd.f32 %v2074, %v2116
        %v2118 = vpop.f32.mrf.mxu0
        %v2119 = vadd.f32 %v2076, %v2118
        %2120 = vdwg.mxu0
        %2121 = vmatprep.subr.bf16.mxu0 %v1558
        %2122 = vmatpush1.bf16.msra.mxu0 %v1557
        %2123 = vmatprep.subr.bf16.mxu0 %v1556
        %2124 = vmatpush1.bf16.msra.mxu0 %v1555
        %2125 = vmatprep.subr.bf16.mxu0 %v1554
        %2126 = vmatpush1.bf16.msra.mxu0 %v1553
        %2127 = vmatprep.subr.bf16.mxu0 %v1552
        %2128 = vmatpush1.bf16.msra.mxu0 %v1551
        %2129 = vmatprep.subr.bf16.mxu0 %v1550
        %2130 = vmatpush1.bf16.msra.mxu0 %v1549
        %2131 = vmatprep.subr.bf16.mxu0 %v1548
        %2132 = vmatpush1.bf16.msra.mxu0 %v1547
        %2133 = vmatprep.subr.bf16.mxu0 %v1546
        %2134 = vmatpush1.bf16.msra.mxu0 %v1545
        %2135 = vmatprep.subr.bf16.mxu0 %v1544
        %2136 = vmatpush1.bf16.msra.mxu0 %v1543
        %2137 = vmatprep.subr.bf16.mxu0 %v1574
        %2138 = vmatpush2.bf16.msra.mxu0 %v1573
        %2139 = vmatprep.subr.bf16.mxu0 %v1572
        %2140 = vmatpush2.bf16.msra.mxu0 %v1571
        %2141 = vmatprep.subr.bf16.mxu0 %v1570
        %2142 = vmatpush2.bf16.msra.mxu0 %v1569
        %2143 = vmatprep.subr.bf16.mxu0 %v1568
        %2144 = vmatpush2.bf16.msra.mxu0 %v1567
        %2145 = vmatprep.subr.bf16.mxu0 %v1566
        %2146 = vmatpush2.bf16.msra.mxu0 %v1565
        %2147 = vmatprep.subr.bf16.mxu0 %v1564
        %2148 = vmatpush2.bf16.msra.mxu0 %v1563
        %2149 = vmatprep.subr.bf16.mxu0 %v1562
        %2150 = vmatpush2.bf16.msra.mxu0 %v1561
        %2151 = vmatprep.subr.bf16.mxu0 %v1560
        %2152 = vmatpush2.bf16.msra.mxu0 %v1559
        %2153 = vmatprep.mubr.bf16.mxu0 %v312
        %2154 = vmatmul.mubr.bf16.gmra.mxu0 %v311
        %v2155 = vpop.f32.mrf.mxu0
        %v2156 = vadd.f32 %v2113, %v2155
        %v2157 = vpop.f32.mrf.mxu0
        %v2158 = vadd.f32 %v2115, %v2157
        %v2159 = vpop.f32.mrf.mxu0
        %v2160 = vadd.f32 %v2117, %v2159
        %v2161 = vpop.f32.mrf.mxu0
        %v2162 = vadd.f32 %v2119, %v2161
        %2163 = vdwg.mxu0
        %2164 = vmatprep.subr.bf16.mxu0 %v1590
        %2165 = vmatpush1.bf16.msra.mxu0 %v1589
        %2166 = vmatprep.subr.bf16.mxu0 %v1588
        %2167 = vmatpush1.bf16.msra.mxu0 %v1587
        %2168 = vmatprep.subr.bf16.mxu0 %v1586
        %2169 = vmatpush1.bf16.msra.mxu0 %v1585
        %2170 = vmatprep.subr.bf16.mxu0 %v1584
        %2171 = vmatpush1.bf16.msra.mxu0 %v1583
        %2172 = vmatprep.subr.bf16.mxu0 %v1582
        %2173 = vmatpush1.bf16.msra.mxu0 %v1581
        %2174 = vmatprep.subr.bf16.mxu0 %v1580
        %2175 = vmatpush1.bf16.msra.mxu0 %v1579
        %2176 = vmatprep.subr.bf16.mxu0 %v1578
        %2177 = vmatpush1.bf16.msra.mxu0 %v1577
        %2178 = vmatprep.subr.bf16.mxu0 %v1576
        %2179 = vmatpush1.bf16.msra.mxu0 %v1575
        %2180 = vmatprep.subr.bf16.mxu0 %v1606
        %2181 = vmatpush2.bf16.msra.mxu0 %v1605
        %2182 = vmatprep.subr.bf16.mxu0 %v1604
        %2183 = vmatpush2.bf16.msra.mxu0 %v1603
        %2184 = vmatprep.subr.bf16.mxu0 %v1602
        %2185 = vmatpush2.bf16.msra.mxu0 %v1601
        %2186 = vmatprep.subr.bf16.mxu0 %v1600
        %2187 = vmatpush2.bf16.msra.mxu0 %v1599
        %2188 = vmatprep.subr.bf16.mxu0 %v1598
        %2189 = vmatpush2.bf16.msra.mxu0 %v1597
        %2190 = vmatprep.subr.bf16.mxu0 %v1596
        %2191 = vmatpush2.bf16.msra.mxu0 %v1595
        %2192 = vmatprep.subr.bf16.mxu0 %v1594
        %2193 = vmatpush2.bf16.msra.mxu0 %v1593
        %2194 = vmatprep.subr.bf16.mxu0 %v1592
        %2195 = vmatpush2.bf16.msra.mxu0 %v1591
        %2196 = vmatprep.mubr.bf16.mxu0 %v314
        %2197 = vmatmul.mubr.bf16.gmra.mxu0 %v313
        %v2198 = vpop.f32.mrf.mxu0
        %v2199 = vadd.f32 %v2156, %v2198
        %v2200 = vpop.f32.mrf.mxu0
        %v2201 = vadd.f32 %v2158, %v2200
        %v2202 = vpop.f32.mrf.mxu0
        %v2203 = vadd.f32 %v2160, %v2202
        %v2204 = vpop.f32.mrf.mxu0
        %v2205 = vadd.f32 %v2162, %v2204
        %2206 = vdwg.mxu0
        %v2207 = vmax.f32 %v2199, 0.0
        %v2208 = vmax.f32 %v2201, 0.0
        %v2209 = vmax.f32 %v2203, 0.0
        %v2210 = vmax.f32 %v2205, 0.0
        %2211 = vst [vmem:[%s261] sm:$0xff] %v2207
        %2212 = vst [vmem:[%s261 + $0x8] sm:$0xff] %v2208
        %2213 = vst [vmem:[%s261 + $0x10] sm:$0xff] %v2209
        %2214 = vst [vmem:[%s261 + $0x18] sm:$0xff] %v2210
        %s2215 = sand.u32 %s121, 1
        %s2216 = scalar_lea.sflag [#allocation4], %s2215
        %s2217 = sand.u32 %s121, 1
        %s2218 = smul.addr %s2217, 32
        %s2219 = scalar_lea.vmem [#allocation8], %s2218
        // Predicated region
        $region45: #{frame_reduce_dim.1} parent=31 // pred_check
          %p2220 = pneg %p131
        $region46: #{frame_reduce_dim.1} parent=31 // pred_check_branch
          %2222 = sbr.rel (%p2220) target = $region48
        $region47: #{frame_reduce_dim.1} parent=31 // pred_region
          %s2223 = smul.u32 2, %s25
          %s2224 = smul.u32 2, %s26
          %s2226 = ssub.s32 512, 512
          %2227 = vsyncadd %s2216, %s2226
          %s2228 = smul.addr %s2223, 4
          %s2229 = sadd.s32 %s2224, %s2228
          %s2230 = smul.addr %s2229, 128
          %s2231 = scalar_lea.hbm %s3, %s2230
          %s2232 = sshll.u32 %s2219, 4
          %s2233 = int_to_ptr.vmem [resolvable:$true] %s2232
          %2238 = dma.vmem_to_hbm [thread:$0]  %s2233, 512, %s2231, %s2216, 256, 512, 16
        $region48: #{frame_reduce_dim.1} parent=31 // pred_fallthru
          _
      $region32: #{frame_reduce_dim.1} parent=5 // pred_fallthru
        _
      %p2239 = scmp.le.s32.totalorder 2, %s16
      // Predicated region
      $region49: #{frame_reduce_dim.1} parent=5 // pred_check
        %p2240 = pneg %p2239
      $region50: #{frame_reduce_dim.1} parent=5 // pred_check_branch
        %2242 = sbr.rel (%p2240) target = $region52
      $region51: #{frame_reduce_dim.1} parent=5 // pred_region
        %s2243 = ssub.s32 %s16, 2
        // Predicated region
        $region53: #{frame_reduce_dim.1} parent=51 // pred_check
          %p2244 = pneg %p137
        $region54: #{frame_reduce_dim.1} parent=51 // pred_check_branch
          %2246 = sbr.rel (%p2244) target = $region56
        $region55: #{frame_reduce_dim.1} parent=51 // pred_region
          %s2247 = sand.u32 %s122, 1
          %s2248 = scalar_lea.sflag [#allocation4], %s2247
          %s2249 = sand.u32 %s122, 1
          %s2250 = smul.addr %s2249, 32
          %s2251 = scalar_lea.vmem [#allocation8], %s2250
          %2252 = dma.done %s2248, 512
        $region56: #{frame_reduce_dim.1} parent=51 // pred_fallthru
          _
      $region52: #{frame_reduce_dim.1} parent=5 // pred_fallthru
        _
    $region6: #{frame_reduce_dim.1} parent=1 // loop_footer
      %s20 = sadd.s32 1, %s16
    $region7: #{frame_reduce_dim.1} parent=1 // loop_footer_branch
      %15 = sbr.rel target = $region3
    $region8: #{frame_reduce_dim.1} parent=1 // loop_exit
      _
    %2253 = vsyncpa [#allocation3], 1
    %s2254 = scalar_lea.sflag [#allocation3], 1
    %2255 = vsyncpa %s2254, 1
    %2256 = vsyncpa [#allocation6], 1
    %s2257 = scalar_lea.sflag [#allocation6], 1
    %2258 = vsyncpa %s2257, 1
    %2259 = vsyncpa [#allocation4], 1
    %s2260 = scalar_lea.sflag [#allocation4], 1
    %2261 = vsyncpa %s2260, 1

</llo_original>
